<compile_context>
chip_gen: v7x
topology: tpu7x:2x2x1
jax: 0.10.0
libtpu: 0.0.40
codegen_flags: <defaults>
</compile_context>

<pallas_src>
import functools

import jax
import jax.numpy as jnp
from jax import lax
from jax.experimental import pallas as pl
from jax.experimental.pallas import tpu as pltpu

LN_EPS = 1e-5  # PyTorch nn.LayerNorm default eps


def _round_up(x, m):
    return (x + m - 1) // m * m


def _tpu_kind():
    try:
        return jax.devices()[0].device_kind.lower()
    except Exception:
        return ""


def _tile_config(n_rows, row_tile=None, k_tile=None):
    """Generation-keyed (row_tile, k_tile, padded_N, vmem_limit)."""
    kind = _tpu_kind()
    is_v5e = ("v5 lite" in kind) or ("v5e" in kind) or ("v5lite" in kind)
    is_v7 = ("v7" in kind) or ("7x" in kind)

    if row_tile is None:
        row_tile = 128 if is_v5e else 256       # v6e/v7x have a 256-wide MXU
    if k_tile is None:
        k_tile = 1024                           # review-recommended 1-2K reduction tile

    # Scoped-VMEM cap: stay well under v7x's 64 MiB physical VMEM; on v5e/v6e (128 MiB
    # physical) use more of the chip.  Unknown device -> conservative.
    vmem_limit = (48 << 20) if (is_v7 or not kind) else (100 << 20)

    n_pr = _round_up(max(n_rows, 1), row_tile)
    tk = _round_up(min(k_tile, n_pr), row_tile)  # multiple of row_tile (and of 128)
    n_p = _round_up(n_pr, tk)                    # multiple of both row_tile and tk
    return row_tile, tk, n_p, vmem_limit


def _pad2(x, shape, dtype):
    """Pad-to-shape + cast, skipping work when nothing needs doing."""
    shape = tuple(shape)
    if x.shape == shape:
        return x if x.dtype == dtype else x.astype(dtype)
    out = jnp.zeros(shape, dtype)
    return out.at[:x.shape[0], :x.shape[1]].set(x.astype(dtype))


def prepare_adjacency(A, *, row_tile=None, k_tile=None):
    """Pad + cast the (static) adjacency once; cache the result across forward calls.

    Feeding the returned array to gcn_forward() skips the per-call pad/cast pass over A,
    which otherwise costs more HBM traffic than both Pallas phases combined.
    """
    n = A.shape[0]
    _, _, n_p, _ = _tile_config(n, row_tile, k_tile)
    return _pad2(A, (n_p, n_p), jnp.bfloat16)


def _phase1_kernel(a_ref, x_ref, w1_ref, b1_ref, w2_ref, c_ref, g_ref, acc_ref,
                   *, hidden_dim):
    k = pl.program_id(1)

    @pl.when(k == 0)
    def _():
        acc_ref[...] = jnp.zeros_like(acc_ref)

    # acc += A_tile @ X_tile            (bf16 operands, f32 accumulate)
    acc_ref[...] += jnp.dot(a_ref[...], x_ref[...],
                            preferred_element_type=jnp.float32)

    @pl.when(k == pl.num_programs(1) - 1)
    def _():
        # F = (A@X) @ W1 + b1.  NOTE: casting the f32 K-accumulator to bf16 here trades
        # accumulated mantissa bits for MXU throughput; fine at the tested tolerance,
        # revisit (f32 matmul) if N / graph degree grows very large.
        f = jnp.dot(acc_ref[...].astype(jnp.bfloat16), w1_ref[...],
                    preferred_element_type=jnp.float32)
        f = f + b1_ref[...]

        # LayerNorm over the true hidden_dim (padded columns of f are exactly zero,
        # so sums over the padded width / hidden_dim give exact masked statistics).
        inv_h = jnp.float32(1.0 / hidden_dim)
        mean = jnp.sum(f, axis=-1, keepdims=True) * inv_h
        mean_sq = jnp.sum(f * f, axis=-1, keepdims=True) * inv_h
        var = jnp.maximum(mean_sq - mean * mean, 0.0)   # clamp f32 cancellation
        f = (f - mean) * lax.rsqrt(var + LN_EPS)

        # Affine folded into layer 2:  G = norm(F) @ (gamma*W2) + beta@W2.
        # Padded rows of W2' are zero, so the nonzero padded columns of norm(F)
        # (-mean/std) contribute nothing.
        g = jnp.dot(f.astype(jnp.bfloat16), w2_ref[...],
                    preferred_element_type=jnp.float32)
        g_ref[...] = (g + c_ref[...]).astype(g_ref.dtype)


def _phase2_kernel(a_ref, g_ref, b2_ref, o_ref, acc_ref):
    k = pl.program_id(1)

    @pl.when(k == 0)
    def _():
        acc_ref[...] = jnp.zeros_like(acc_ref)

    # acc += A_tile @ G_tile
    acc_ref[...] += jnp.dot(a_ref[...], g_ref[...],
                            preferred_element_type=jnp.float32)

    @pl.when(k == pl.num_programs(1) - 1)
    def _():
        o_ref[...] = (acc_ref[...] + b2_ref[...]).astype(o_ref.dtype)


def gcn_forward(A, X, W1, b1, gamma, beta, W2, b2, *, row_tile=None, k_tile=None):
    N, D_in = X.shape
    H = W1.shape[1]

    tm, tk, N_p, vmem_limit = _tile_config(N, row_tile, k_tile)
    D_p = _round_up(D_in, 128)
    H_p = _round_up(H, 128)

    f32, bf16 = jnp.float32, jnp.bfloat16

    # Adjacency: reuse a pre-prepared padded bf16 A if supplied (prepare_adjacency),
    # otherwise pad/cast here (no-op copy avoided when shapes/dtype already match).
    if A.shape == (N_p, N_p) and A.dtype == bf16:
        A_p = A
    else:
        A_p = _pad2(A, (N_p, N_p), bf16)

    X_p = _pad2(X, (N_p, D_p), bf16)
    W1_p = _pad2(W1, (D_p, H_p), bf16)
    b1_p = _pad2(b1.reshape(1, -1), (1, H_p), f32)

    # Fold the LayerNorm affine:  Fn@W2 = norm(F) @ (gamma*W2) + beta@W2   (exact).
    W2_eff = gamma.reshape(-1, 1).astype(f32) * W2.astype(f32)
    c_eff = beta.reshape(1, -1).astype(f32) @ W2.astype(f32)
    W2_p = _pad2(W2_eff, (H_p, D_p), bf16)
    c_p = _pad2(c_eff, (1, D_p), f32)
    b2_p = _pad2(b2.reshape(1, -1), (1, D_p), f32)

    grid = (N_p // tm, N_p // tk)
    cparams = pltpu.CompilerParams(
        dimension_semantics=("parallel", "arbitrary"),
        vmem_limit_bytes=vmem_limit,
    )

    def _row_k(i, k):
        return (i, k)

    def _k_row(i, k):
        return (k, 0)

    def _const2(i, k):
        return (0, 0)

    def _out_map(i, k):
        return (i, 0)

    def _const_spec(shape):
        # Constant-index blocks never change across the grid -> single buffer (saves VMEM).
        try:
            return pl.BlockSpec(shape, _const2, pipeline_mode=pl.Buffered(1))
        except (TypeError, AttributeError):   # older Pallas without pipeline_mode
            return pl.BlockSpec(shape, _const2)

    # Phase 1: G = LayerNorm(A @ X @ W1 + b1) @ W2' + c, row-tiled and K-tiled over A.
    g = pl.pallas_call(
        functools.partial(_phase1_kernel, hidden_dim=H),
        out_shape=jax.ShapeDtypeStruct((N_p, D_p), bf16),
        grid=grid,
        in_specs=[
            pl.BlockSpec((tm, tk), _row_k),       # A row/K tile (streamed)
            pl.BlockSpec((tk, D_p), _k_row),      # X K tile (streamed)
            _const_spec((D_p, H_p)),              # W1
            _const_spec((1, H_p)),                # b1
            _const_spec((H_p, D_p)),              # W2' = gamma * W2
            _const_spec((1, D_p)),                # c   = beta @ W2
        ],
        out_specs=pl.BlockSpec((tm, D_p), _out_map),
        scratch_shapes=[pltpu.VMEM((tm, D_p), f32)],
        compiler_params=cparams,
    )(A_p, X_p, W1_p, b1_p, W2_p, c_p)

    # Phase 2: out = A @ G + b2, row-tiled and K-tiled over A.
    out_p = pl.pallas_call(
        _phase2_kernel,
        out_shape=jax.ShapeDtypeStruct((N_p, D_p), f32),
        grid=grid,
        in_specs=[
            pl.BlockSpec((tm, tk), _row_k),       # A row/K tile (streamed)
            pl.BlockSpec((tk, D_p), _k_row),      # G K tile (streamed)
            _const_spec((1, D_p)),                # b2
        ],
        out_specs=pl.BlockSpec((tm, D_p), _out_map),
        scratch_shapes=[pltpu.VMEM((tm, D_p), f32)],
        compiler_params=cparams,
    )(A_p, g, b2_p)

    return out_p[:N, :D_in]


def reference_forward(A, X, W1, b1, gamma, beta, W2, b2):
    # Pure-JAX f32 reference matching the PyTorch module (eval-mode dropout = identity).
    F1 = A @ X
    F1 = F1 @ W1 + b1
    mean = jnp.mean(F1, axis=-1, keepdims=True)
    var = jnp.mean((F1 - mean) ** 2, axis=-1, keepdims=True)
    F1 = (F1 - mean) / jnp.sqrt(var + LN_EPS) * gamma + beta
    F2 = A @ F1
    return F2 @ W2 + b2


if __name__ == "__main__":
    # Small shapes consistent with the module: N nodes, input_dim, hidden_dim.
    N, D_IN, H = 16, 32, 64

    key = jax.random.PRNGKey(0)
    k_a, k_x, k_w1, k_b1, k_w2, k_b2 = jax.random.split(key, 6)

    # Node features and dense row-normalized adjacency.
    X = jax.random.normal(k_x, (N, D_IN), dtype=jnp.float32)
    A_raw = jax.random.uniform(k_a, (N, N), dtype=jnp.float32)
    A = A_raw / jnp.sum(A_raw, axis=-1, keepdims=True)

    # Deterministic parameter init (mimic torch.nn.Linear uniform(-1/sqrt(fan_in), ...)).
    lim1 = 1.0 / (D_IN ** 0.5)
    W1 = jax.random.uniform(k_w1, (D_IN, H), dtype=jnp.float32, minval=-lim1, maxval=lim1)
    b1 = jax.random.uniform(k_b1, (1, H), dtype=jnp.float32, minval=-lim1, maxval=lim1)
    lim2 = 1.0 / (H ** 0.5)
    W2 = jax.random.uniform(k_w2, (H, D_IN), dtype=jnp.float32, minval=-lim2, maxval=lim2)
    b2 = jax.random.uniform(k_b2, (1, D_IN), dtype=jnp.float32, minval=-lim2, maxval=lim2)
    gamma = jnp.ones((1, H), dtype=jnp.float32)   # nn.LayerNorm default weight
    beta = jnp.zeros((1, H), dtype=jnp.float32)   # nn.LayerNorm default bias

    ref = reference_forward(A, X, W1, b1, gamma, beta, W2, b2)

    # Preferred path: prepare (pad+cast) the static adjacency once, reuse across calls.
    A_prep = prepare_adjacency(A)
    out = gcn_forward(A_prep, X, W1, b1, gamma, beta, W2, b2)
    out = jax.block_until_ready(out)
    assert out.shape == (N, D_IN)
    # bf16 MXU operands + layer-2 reassociation -> relaxed tolerance vs f32 reference.
    assert jnp.allclose(out, ref, atol=5e-2, rtol=5e-2), "mismatch vs reference (prepared A)"

    # Raw-A path also works (pads/casts internally).
    out_raw = jax.block_until_ready(gcn_forward(A, X, W1, b1, gamma, beta, W2, b2))
    assert jnp.allclose(out_raw, ref, atol=5e-2, rtol=5e-2), "mismatch vs reference (raw A)"

    print("KERNEL_OK")
</pallas_src>

<mosaic_0001>
module attributes {stable_mosaic.version = 11 : i64} {
  func.func @_phase1_kernel(%arg0: i32, %arg1: i32, %arg2: memref<256x256xbf16, #tpu.memory_space<vmem>>, %arg3: memref<256x128xbf16, #tpu.memory_space<vmem>>, %arg4: memref<128x128xbf16, #tpu.memory_space<vmem>>, %arg5: memref<1x128xf32, #tpu.memory_space<vmem>>, %arg6: memref<128x128xbf16, #tpu.memory_space<vmem>>, %arg7: memref<1x128xf32, #tpu.memory_space<vmem>>, %arg8: memref<256x128xbf16, #tpu.memory_space<vmem>>, %arg9: memref<256x128xf32, #tpu.memory_space<vmem>>) attributes {dimension_semantics = [#tpu.dimension_semantics<parallel>, #tpu.dimension_semantics<arbitrary>], iteration_bounds = array<i64: 1, 1>, scalar_prefetch = 0 : i64, scratch_operands = 1 : i64, tpu.core_type = #tpu.core_type<tc>, window_params = [{transform_indices = @transform_0, window_bounds = array<i64: 256, 256>}, {transform_indices = @transform_1, window_bounds = array<i64: 256, 128>}, {pipeline_mode = #tpu.pipeline_mode<synchronous>, transform_indices = @transform_2, window_bounds = array<i64: 128, 128>}, {pipeline_mode = #tpu.pipeline_mode<synchronous>, transform_indices = @transform_3, window_bounds = array<i64: 1, 128>}, {pipeline_mode = #tpu.pipeline_mode<synchronous>, transform_indices = @transform_4, window_bounds = array<i64: 128, 128>}, {pipeline_mode = #tpu.pipeline_mode<synchronous>, transform_indices = @transform_5, window_bounds = array<i64: 1, 128>}, {transform_indices = @transform_6, window_bounds = array<i64: 256, 128>}]} {
    %c0_i32 = arith.constant 0 : i32
    %0 = arith.cmpi eq, %arg1, %c0_i32 : i32
    %1 = arith.extui %0 : i1 to i32
    %c0_i32_0 = arith.constant 0 : i32
    %2 = arith.cmpi ne, %1, %c0_i32_0 : i32
    scf.if %2 {
      %cst_10 = arith.constant 0.000000e+00 : f32
      %12 = vector.broadcast %cst_10 : f32 to vector<256x128xf32>
      %c0_11 = arith.constant 0 : index
      %c0_12 = arith.constant 0 : index
      %13 = vector.load %arg9[%c0_11, %c0_12] : memref<256x128xf32, #tpu.memory_space<vmem>>, vector<256x128xf32>
      tpu.vector_store %arg9[%c0_11, %c0_12], %12 {strides = array<i32>} : memref<256x128xf32, #tpu.memory_space<vmem>>, vector<256x128xf32>,
    } else {
    }
    %c0 = arith.constant 0 : index
    %c0_1 = arith.constant 0 : index
    %3 = vector.load %arg9[%c0, %c0_1] : memref<256x128xf32, #tpu.memory_space<vmem>>, vector<256x128xf32>
    %c0_2 = arith.constant 0 : index
    %c0_3 = arith.constant 0 : index
    %4 = vector.load %arg2[%c0_2, %c0_3] : memref<256x256xbf16, #tpu.memory_space<vmem>>, vector<256x256xbf16>
    %c0_4 = arith.constant 0 : index
    %c0_5 = arith.constant 0 : index
    %5 = vector.load %arg3[%c0_4, %c0_5] : memref<256x128xbf16, #tpu.memory_space<vmem>>, vector<256x128xbf16>
    %cst = arith.constant dense<0.000000e+00> : vector<256x128xf32>
    %6 = tpu.matmul %4, %5, %cst {dimension_numbers = #tpu.dot_dimension_numbers<[1], [0], [0], [1], [0, 0, 1, 1], [], []>} : vector<256x256xbf16>, vector<256x128xbf16>, vector<256x128xf32> -> vector<256x128xf32>
    %7 = arith.addf %3, %6 : vector<256x128xf32>
    %c0_6 = arith.constant 0 : index
    %c0_7 = arith.constant 0 : index
    %8 = vector.load %arg9[%c0_6, %c0_7] : memref<256x128xf32, #tpu.memory_space<vmem>>, vector<256x128xf32>
    tpu.vector_store %arg9[%c0_6, %c0_7], %7 {strides = array<i32>} : memref<256x128xf32, #tpu.memory_space<vmem>>, vector<256x128xf32>,
    %c0_i32_8 = arith.constant 0 : i32
    %9 = arith.cmpi eq, %arg1, %c0_i32_8 : i32
    %10 = arith.extui %9 : i1 to i32
    %c0_i32_9 = arith.constant 0 : i32
    %11 = arith.cmpi ne, %10, %c0_i32_9 : i32
    scf.if %11 {
      %c0_10 = arith.constant 0 : index
      %c0_11 = arith.constant 0 : index
      %12 = vector.load %arg9[%c0_10, %c0_11] : memref<256x128xf32, #tpu.memory_space<vmem>>, vector<256x128xf32>
      %13 = arith.truncf %12 : vector<256x128xf32> to vector<256x128xbf16>
      %c0_12 = arith.constant 0 : index
      %c0_13 = arith.constant 0 : index
      %14 = vector.load %arg4[%c0_12, %c0_13] : memref<128x128xbf16, #tpu.memory_space<vmem>>, vector<128x128xbf16>
      %cst_14 = arith.constant dense<0.000000e+00> : vector<256x128xf32>
      %15 = tpu.matmul %13, %14, %cst_14 {dimension_numbers = #tpu.dot_dimension_numbers<[1], [0], [0], [1], [0, 0, 1, 1], [], []>} : vector<256x128xbf16>, vector<128x128xbf16>, vector<256x128xf32> -> vector<256x128xf32>
      %c0_15 = arith.constant 0 : index
      %c0_16 = arith.constant 0 : index
      %16 = vector.load %arg5[%c0_15, %c0_16] : memref<1x128xf32, #tpu.memory_space<vmem>>, vector<1x128xf32>
      %17 = vector.broadcast %16 : vector<1x128xf32> to vector<256x128xf32>
      %18 = arith.addf %15, %17 : vector<256x128xf32>
      %cst_17 = arith.constant dense<0.000000e+00> : vector<256xf32>
      %19 = vector.multi_reduction <add>, %18, %cst_17 [1] : vector<256x128xf32> to vector<256xf32>
      %20 = vector.shape_cast %19 : vector<256xf32> to vector<256x1xf32>
      %cst_18 = arith.constant 1.562500e-02 : f32
      %21 = vector.broadcast %cst_18 : f32 to vector<256x1xf32>
      %22 = arith.mulf %20, %21 : vector<256x1xf32>
      %23 = arith.mulf %18, %18 : vector<256x128xf32>
      %cst_19 = arith.constant dense<0.000000e+00> : vector<256xf32>
      %24 = vector.multi_reduction <add>, %23, %cst_19 [1] : vector<256x128xf32> to vector<256xf32>
      %25 = vector.shape_cast %24 : vector<256xf32> to vector<256x1xf32>
      %cst_20 = arith.constant 1.562500e-02 : f32
      %26 = vector.broadcast %cst_20 : f32 to vector<256x1xf32>
      %27 = arith.mulf %25, %26 : vector<256x1xf32>
      %28 = arith.mulf %22, %22 : vector<256x1xf32>
      %29 = arith.subf %27, %28 : vector<256x1xf32>
      %cst_21 = arith.constant 0.000000e+00 : f32
      %30 = vector.broadcast %cst_21 : f32 to vector<256x1xf32>
      %31 = arith.maximumf %29, %30 : vector<256x1xf32>
      %32 = vector.broadcast %22 : vector<256x1xf32> to vector<256x128xf32>
      %33 = arith.subf %18, %32 : vector<256x128xf32>
      %cst_22 = arith.constant 9.99999974E-6 : f32
      %34 = vector.broadcast %cst_22 : f32 to vector<256x1xf32>
      %35 = arith.addf %31, %34 : vector<256x1xf32>
      %36 = math.rsqrt %35 : vector<256x1xf32>
      %37 = vector.broadcast %36 : vector<256x1xf32> to vector<256x128xf32>
      %38 = arith.mulf %33, %37 : vector<256x128xf32>
      %39 = arith.truncf %38 : vector<256x128xf32> to vector<256x128xbf16>
      %c0_23 = arith.constant 0 : index
      %c0_24 = arith.constant 0 : index
      %40 = vector.load %arg6[%c0_23, %c0_24] : memref<128x128xbf16, #tpu.memory_space<vmem>>, vector<128x128xbf16>
      %cst_25 = arith.constant dense<0.000000e+00> : vector<256x128xf32>
      %41 = tpu.matmul %39, %40, %cst_25 {dimension_numbers = #tpu.dot_dimension_numbers<[1], [0], [0], [1], [0, 0, 1, 1], [], []>} : vector<256x128xbf16>, vector<128x128xbf16>, vector<256x128xf32> -> vector<256x128xf32>
      %c0_26 = arith.constant 0 : index
      %c0_27 = arith.constant 0 : index
      %42 = vector.load %arg7[%c0_26, %c0_27] : memref<1x128xf32, #tpu.memory_space<vmem>>, vector<1x128xf32>
      %43 = vector.broadcast %42 : vector<1x128xf32> to vector<256x128xf32>
      %44 = arith.addf %41, %43 : vector<256x128xf32>
      %45 = arith.truncf %44 : vector<256x128xf32> to vector<256x128xbf16>
      %c0_28 = arith.constant 0 : index
      %c0_29 = arith.constant 0 : index
      %46 = vector.load %arg8[%c0_28, %c0_29] : memref<256x128xbf16, #tpu.memory_space<vmem>>, vector<256x128xbf16>
      tpu.vector_store %arg8[%c0_28, %c0_29], %45 {strides = array<i32>} : memref<256x128xbf16, #tpu.memory_space<vmem>>, vector<256x128xbf16>,
    } else {
    }
    return
  }
  func.func @transform_0(%arg0: i32, %arg1: i32) -> (i32, i32) {
    %c0_i32 = arith.constant 0 : i32
    return %arg0, %arg1 : i32, i32
  }
  func.func @transform_1(%arg0: i32, %arg1: i32) -> (i32, i32) {
    %c0_i32 = arith.constant 0 : i32
    %c0_i32_0 = arith.constant 0 : i32
    return %arg1, %c0_i32 : i32, i32
  }
  func.func @transform_2(%arg0: i32, %arg1: i32) -> (i32, i32) {
    %c0_i32 = arith.constant 0 : i32
    %c0_i32_0 = arith.constant 0 : i32
    %c0_i32_1 = arith.constant 0 : i32
    return %c0_i32, %c0_i32_0 : i32, i32
  }
  func.func @transform_3(%arg0: i32, %arg1: i32) -> (i32, i32) {
    %c0_i32 = arith.constant 0 : i32
    %c0_i32_0 = arith.constant 0 : i32
    %c0_i32_1 = arith.constant 0 : i32
    return %c0_i32, %c0_i32_0 : i32, i32
  }
  func.func @transform_4(%arg0: i32, %arg1: i32) -> (i32, i32) {
    %c0_i32 = arith.constant 0 : i32
    %c0_i32_0 = arith.constant 0 : i32
    %c0_i32_1 = arith.constant 0 : i32
    return %c0_i32, %c0_i32_0 : i32, i32
  }
  func.func @transform_5(%arg0: i32, %arg1: i32) -> (i32, i32) {
    %c0_i32 = arith.constant 0 : i32
    %c0_i32_0 = arith.constant 0 : i32
    %c0_i32_1 = arith.constant 0 : i32
    return %c0_i32, %c0_i32_0 : i32, i32
  }
  func.func @transform_6(%arg0: i32, %arg1: i32) -> (i32, i32) {
    %c0_i32 = arith.constant 0 : i32
    %c0_i32_0 = arith.constant 0 : i32
    return %arg0, %c0_i32 : i32, i32
  }
}

</mosaic_0001>

<llo_original>
// kernel: tpu_custom_call.1
$region0: #{tpu_custom_call.1}
  #allocation0 [shape = 'u32[]', space=smem, size = 0x4, offset = 0x4, fixed_abs, tag = 'smem constant byte address 0x4 - core index']
  #allocation1 [shape = 'u32[144,128]{1,0:T(1,128)}', space=vmem, size = 0x12000, scoped, tag = 'internal scratch']
  #allocation2 [shape = 'f32[256,128]{1,0:T(8,128)}', space=vmem, size = 0x20000, scoped, tag = 'scratch operand']
  %s0 = inlined_call_operand.hbm [shape: bf16[256,256], index: 0, kind: input, shape index: {}]
  %s1 = inlined_call_operand.hbm [shape: bf16[256,128], index: 1, kind: input, shape index: {}]
  %s2 = inlined_call_operand.hbm [shape: bf16[128,128], index: 2, kind: input, shape index: {}]
  %s3 = inlined_call_operand.hbm [shape: f32[1,128], index: 3, kind: input, shape index: {}]
  %s4 = inlined_call_operand.hbm [shape: bf16[128,128], index: 4, kind: input, shape index: {}]
  %s5 = inlined_call_operand.hbm [shape: f32[1,128], index: 5, kind: input, shape index: {}]
  %s6 = inlined_call_operand.hbm [shape: bf16[256,128], index: 6, kind: output, shape index: {}]
  %s7 = sld [smem:[#allocation0]]
  $region66: #{tpu_custom_call.1} parent=0
    _
  %s9 = ssub.s32 1, %s7
  %s10 = scalar_select 0, %s9, %s7
  $region1: #{tpu_custom_call.1} parent=0
    #allocation3 [shape = 'u8[131072]{0}', space=vmem, size = 0x20000, scoped, tag = 'input window, operand 0, single buffered']
    #allocation4 [shape = 's32[1]{0}', space=sflag, size = 0x4, scoped, tag = 'scoped memory for tpu_custom_call.1']
    #allocation5 [shape = 's32[1]{0}', space=sflag, size = 0x4, scoped, tag = 'scoped memory for tpu_custom_call.1']
    #allocation6 [shape = 'u8[65536]{0}', space=vmem, size = 0x10000, scoped, tag = 'input window, operand 1, single buffered']
    #allocation7 [shape = 's32[1]{0}', space=sflag, size = 0x4, scoped, tag = 'scoped memory for tpu_custom_call.1']
    #allocation8 [shape = 'u8[32768]{0}', space=vmem, size = 0x8000, scoped, tag = 'input window, operand 2, single buffered']
    #allocation9 [shape = 'u8[512]{0}', space=vmem, size = 0x400, scoped, tag = 'input window, operand 3, single buffered']
    #allocation10 [shape = 's32[1]{0}', space=sflag, size = 0x4, scoped, tag = 'scoped memory for tpu_custom_call.1']
    #allocation11 [shape = 'u8[32768]{0}', space=vmem, size = 0x8000, scoped, tag = 'input window, operand 4, single buffered']
    #allocation12 [shape = 'u8[512]{0}', space=vmem, size = 0x400, scoped, tag = 'input window, operand 5, single buffered']
    #allocation13 [shape = 's32[1]{0}', space=sflag, size = 0x4, scoped, tag = 'scoped memory for tpu_custom_call.1']
    #allocation14 [shape = 'u8[65536]{0}', space=vmem, size = 0x10000, scoped, tag = 'output window, operand 0, single buffered']
    %11 = vsyncpa [#allocation4], 0
    %12 = vsyncpa [#allocation7], 0
    %13 = vsyncpa [#allocation10], 0
    %14 = vsyncpa [#allocation13], 0
    %15 = vsyncpa [#allocation5], 0
    // Predicated region
    $region2: #{tpu_custom_call.1} parent=1 // pred_check
      _
    $region3: #{tpu_custom_call.1} parent=1 // pred_check_branch
      %17 = sbr.rel (0) target = $region5
    $region4: #{tpu_custom_call.1} parent=1 // pred_region
      %s19 = ssub.s32 4096, 4096
      %20 = vsyncadd [#allocation4], %s19
      %s21 = sshll.u32 [#allocation3], 4
      %s22 = int_to_ptr.vmem [resolvable:$true] %s21
      %27 = dma.hbm_to_vmem [thread:$0]  %s0, 4096, %s22, [#allocation4], 128, 128, 8
    $region5: #{tpu_custom_call.1} parent=1 // pred_fallthru
      _
    // Predicated region
    $region6: #{tpu_custom_call.1} parent=1 // pred_check
      _
    $region7: #{tpu_custom_call.1} parent=1 // pred_check_branch
      %29 = sbr.rel (0) target = $region9
    $region8: #{tpu_custom_call.1} parent=1 // pred_region
      %s31 = ssub.s32 2048, 2048
      %32 = vsyncadd [#allocation7], %s31
      %s33 = sshll.u32 [#allocation6], 4
      %s34 = int_to_ptr.vmem [resolvable:$true] %s33
      %39 = dma.hbm_to_vmem [thread:$0]  %s1, 2048, %s34, [#allocation7], 64, 64, 4
    $region9: #{tpu_custom_call.1} parent=1 // pred_fallthru
      _
    // Predicated region
    $region10: #{tpu_custom_call.1} parent=1 // pred_check
      _
    $region11: #{tpu_custom_call.1} parent=1 // pred_check_branch
      %41 = sbr.rel (0) target = $region13
    $region12: #{tpu_custom_call.1} parent=1 // pred_region
      %s43 = ssub.s32 1024, 1024
      %44 = vsyncadd [#allocation7], %s43
      %s45 = sshll.u32 [#allocation8], 4
      %s46 = int_to_ptr.vmem [resolvable:$true] %s45
      %51 = dma.hbm_to_vmem [thread:$0]  %s2, 1024, %s46, [#allocation7], 64, 64, 4
    $region13: #{tpu_custom_call.1} parent=1 // pred_fallthru
      _
    // Predicated region
    $region14: #{tpu_custom_call.1} parent=1 // pred_check
      _
    $region15: #{tpu_custom_call.1} parent=1 // pred_check_branch
      %53 = sbr.rel (0) target = $region17
    $region16: #{tpu_custom_call.1} parent=1 // pred_region
      %s55 = ssub.s32 16, 16
      %56 = vsyncadd [#allocation10], %s55
      %s58 = sshll.u32 [#allocation9], 4
      %s59 = int_to_ptr.vmem [resolvable:$true] %s58
      %61 = dma.hbm_to_vmem [thread:$0]  %s3, 16, %s59, [#allocation10]
    $region17: #{tpu_custom_call.1} parent=1 // pred_fallthru
      _
    // Predicated region
    $region18: #{tpu_custom_call.1} parent=1 // pred_check
      _
    $region19: #{tpu_custom_call.1} parent=1 // pred_check_branch
      %63 = sbr.rel (0) target = $region21
    $region20: #{tpu_custom_call.1} parent=1 // pred_region
      %s65 = ssub.s32 1024, 1024
      %66 = vsyncadd [#allocation10], %s65
      %s67 = sshll.u32 [#allocation11], 4
      %s68 = int_to_ptr.vmem [resolvable:$true] %s67
      %73 = dma.hbm_to_vmem [thread:$0]  %s4, 1024, %s68, [#allocation10], 64, 64, 4
    $region21: #{tpu_custom_call.1} parent=1 // pred_fallthru
      _
    // Predicated region
    $region22: #{tpu_custom_call.1} parent=1 // pred_check
      _
    $region23: #{tpu_custom_call.1} parent=1 // pred_check_branch
      %75 = sbr.rel (0) target = $region25
    $region24: #{tpu_custom_call.1} parent=1 // pred_region
      %s77 = ssub.s32 16, 16
      %78 = vsyncadd [#allocation13], %s77
      %s80 = sshll.u32 [#allocation12], 4
      %s81 = int_to_ptr.vmem [resolvable:$true] %s80
      %83 = dma.hbm_to_vmem [thread:$0]  %s5, 16, %s81, [#allocation13]
    $region25: #{tpu_custom_call.1} parent=1 // pred_fallthru
      _
    // Predicated region
    $region26: #{tpu_custom_call.1} parent=1 // pred_check
      _
    $region27: #{tpu_custom_call.1} parent=1 // pred_check_branch
      %85 = sbr.rel (0) target = $region29
    $region28: #{tpu_custom_call.1} parent=1 // pred_region
      %86 = dma.done [#allocation4], 4096
    $region29: #{tpu_custom_call.1} parent=1 // pred_fallthru
      _
    // Predicated region
    $region30: #{tpu_custom_call.1} parent=1 // pred_check
      _
    $region31: #{tpu_custom_call.1} parent=1 // pred_check_branch
      %88 = sbr.rel (0) target = $region33
    $region32: #{tpu_custom_call.1} parent=1 // pred_region
      %89 = dma.done [#allocation7], 2048
    $region33: #{tpu_custom_call.1} parent=1 // pred_fallthru
      _
    // Predicated region
    $region34: #{tpu_custom_call.1} parent=1 // pred_check
      _
    $region35: #{tpu_custom_call.1} parent=1 // pred_check_branch
      %91 = sbr.rel (0) target = $region37
    $region36: #{tpu_custom_call.1} parent=1 // pred_region
      %92 = dma.done [#allocation7], 1024
    $region37: #{tpu_custom_call.1} parent=1 // pred_fallthru
      _
    // Predicated region
    $region38: #{tpu_custom_call.1} parent=1 // pred_check
      _
    $region39: #{tpu_custom_call.1} parent=1 // pred_check_branch
      %94 = sbr.rel (0) target = $region41
    $region40: #{tpu_custom_call.1} parent=1 // pred_region
      %95 = dma.done [#allocation10], 16
    $region41: #{tpu_custom_call.1} parent=1 // pred_fallthru
      _
    // Predicated region
    $region42: #{tpu_custom_call.1} parent=1 // pred_check
      _
    $region43: #{tpu_custom_call.1} parent=1 // pred_check_branch
      %97 = sbr.rel (0) target = $region45
    $region44: #{tpu_custom_call.1} parent=1 // pred_region
      %98 = dma.done [#allocation10], 1024
    $region45: #{tpu_custom_call.1} parent=1 // pred_fallthru
      _
    // Predicated region
    $region46: #{tpu_custom_call.1} parent=1 // pred_check
      _
    $region47: #{tpu_custom_call.1} parent=1 // pred_check_branch
      %100 = sbr.rel (0) target = $region49
    $region48: #{tpu_custom_call.1} parent=1 // pred_region
      %101 = dma.done [#allocation13], 16
    $region49: #{tpu_custom_call.1} parent=1 // pred_fallthru
      _
    %p103 = scmp.eq.s32.totalorder 0, 0
    // Predicated region
    $region50: #{tpu_custom_call.1} parent=1 // pred_check
      %p104 = pneg %p103
    $region51: #{tpu_custom_call.1} parent=1 // pred_check_branch
      %106 = sbr.rel (%p104) target = $region53
    $region52: #{tpu_custom_call.1} parent=1 // pred_region
      %107 = vst [vmem:[#allocation2] sm:$0xff] 0.0
      %108 = vst [vmem:[#allocation2 + $0x8] sm:$0xff] 0.0
      %109 = vst [vmem:[#allocation2 + $0x10] sm:$0xff] 0.0
      %110 = vst [vmem:[#allocation2 + $0x18] sm:$0xff] 0.0
      %111 = vst [vmem:[#allocation2 + $0x20] sm:$0xff] 0.0
      %112 = vst [vmem:[#allocation2 + $0x28] sm:$0xff] 0.0
      %113 = vst [vmem:[#allocation2 + $0x30] sm:$0xff] 0.0
      %114 = vst [vmem:[#allocation2 + $0x38] sm:$0xff] 0.0
      %115 = vst [vmem:[#allocation2 + $0x40] sm:$0xff] 0.0
      %116 = vst [vmem:[#allocation2 + $0x48] sm:$0xff] 0.0
      %117 = vst [vmem:[#allocation2 + $0x50] sm:$0xff] 0.0
      %118 = vst [vmem:[#allocation2 + $0x58] sm:$0xff] 0.0
      %119 = vst [vmem:[#allocation2 + $0x60] sm:$0xff] 0.0
      %120 = vst [vmem:[#allocation2 + $0x68] sm:$0xff] 0.0
      %121 = vst [vmem:[#allocation2 + $0x70] sm:$0xff] 0.0
      %122 = vst [vmem:[#allocation2 + $0x78] sm:$0xff] 0.0
      %123 = vst [vmem:[#allocation2 + $0x80] sm:$0xff] 0.0
      %124 = vst [vmem:[#allocation2 + $0x88] sm:$0xff] 0.0
      %125 = vst [vmem:[#allocation2 + $0x90] sm:$0xff] 0.0
      %126 = vst [vmem:[#allocation2 + $0x98] sm:$0xff] 0.0
      %127 = vst [vmem:[#allocation2 + $0xa0] sm:$0xff] 0.0
      %128 = vst [vmem:[#allocation2 + $0xa8] sm:$0xff] 0.0
      %129 = vst [vmem:[#allocation2 + $0xb0] sm:$0xff] 0.0
      %130 = vst [vmem:[#allocation2 + $0xb8] sm:$0xff] 0.0
      %131 = vst [vmem:[#allocation2 + $0xc0] sm:$0xff] 0.0
      %132 = vst [vmem:[#allocation2 + $0xc8] sm:$0xff] 0.0
      %133 = vst [vmem:[#allocation2 + $0xd0] sm:$0xff] 0.0
      %134 = vst [vmem:[#allocation2 + $0xd8] sm:$0xff] 0.0
      %135 = vst [vmem:[#allocation2 + $0xe0] sm:$0xff] 0.0
      %136 = vst [vmem:[#allocation2 + $0xe8] sm:$0xff] 0.0
      %137 = vst [vmem:[#allocation2 + $0xf0] sm:$0xff] 0.0
      %138 = vst [vmem:[#allocation2 + $0xf8] sm:$0xff] 0.0
    $region53: #{tpu_custom_call.1} parent=1 // pred_fallthru
      _
    %v139 = vld [vmem:[#allocation2] sm:$0xff]
    %v140 = vld [vmem:[#allocation2 + $0x8] sm:$0xff]
    %v141 = vld [vmem:[#allocation2 + $0x10] sm:$0xff]
    %v142 = vld [vmem:[#allocation2 + $0x18] sm:$0xff]
    %v143 = vld [vmem:[#allocation2 + $0x20] sm:$0xff]
    %v144 = vld [vmem:[#allocation2 + $0x28] sm:$0xff]
    %v145 = vld [vmem:[#allocation2 + $0x30] sm:$0xff]
    %v146 = vld [vmem:[#allocation2 + $0x38] sm:$0xff]
    %v147 = vld [vmem:[#allocation2 + $0x40] sm:$0xff]
    %v148 = vld [vmem:[#allocation2 + $0x48] sm:$0xff]
    %v149 = vld [vmem:[#allocation2 + $0x50] sm:$0xff]
    %v150 = vld [vmem:[#allocation2 + $0x58] sm:$0xff]
    %v151 = vld [vmem:[#allocation2 + $0x60] sm:$0xff]
    %v152 = vld [vmem:[#allocation2 + $0x68] sm:$0xff]
    %v153 = vld [vmem:[#allocation2 + $0x70] sm:$0xff]
    %v154 = vld [vmem:[#allocation2 + $0x78] sm:$0xff]
    %v155 = vld [vmem:[#allocation2 + $0x80] sm:$0xff]
    %v156 = vld [vmem:[#allocation2 + $0x88] sm:$0xff]
    %v157 = vld [vmem:[#allocation2 + $0x90] sm:$0xff]
    %v158 = vld [vmem:[#allocation2 + $0x98] sm:$0xff]
    %v159 = vld [vmem:[#allocation2 + $0xa0] sm:$0xff]
    %v160 = vld [vmem:[#allocation2 + $0xa8] sm:$0xff]
    %v161 = vld [vmem:[#allocation2 + $0xb0] sm:$0xff]
    %v162 = vld [vmem:[#allocation2 + $0xb8] sm:$0xff]
    %v163 = vld [vmem:[#allocation2 + $0xc0] sm:$0xff]
    %v164 = vld [vmem:[#allocation2 + $0xc8] sm:$0xff]
    %v165 = vld [vmem:[#allocation2 + $0xd0] sm:$0xff]
    %v166 = vld [vmem:[#allocation2 + $0xd8] sm:$0xff]
    %v167 = vld [vmem:[#allocation2 + $0xe0] sm:$0xff]
    %v168 = vld [vmem:[#allocation2 + $0xe8] sm:$0xff]
    %v169 = vld [vmem:[#allocation2 + $0xf0] sm:$0xff]
    %v170 = vld [vmem:[#allocation2 + $0xf8] sm:$0xff]
    %v171 = vld [vmem:[#allocation3] sm:$0xff]
    %v172 = vld [vmem:[#allocation3 + $0x8] sm:$0xff]
    %v173 = vld [vmem:[#allocation3 + $0x10] sm:$0xff]
    %v174 = vld [vmem:[#allocation3 + $0x18] sm:$0xff]
    %v175 = vld [vmem:[#allocation3 + $0x20] sm:$0xff]
    %v176 = vld [vmem:[#allocation3 + $0x28] sm:$0xff]
    %v177 = vld [vmem:[#allocation3 + $0x30] sm:$0xff]
    %v178 = vld [vmem:[#allocation3 + $0x38] sm:$0xff]
    %v179 = vld [vmem:[#allocation3 + $0x40] sm:$0xff]
    %v180 = vld [vmem:[#allocation3 + $0x48] sm:$0xff]
    %v181 = vld [vmem:[#allocation3 + $0x50] sm:$0xff]
    %v182 = vld [vmem:[#allocation3 + $0x58] sm:$0xff]
    %v183 = vld [vmem:[#allocation3 + $0x60] sm:$0xff]
    %v184 = vld [vmem:[#allocation3 + $0x68] sm:$0xff]
    %v185 = vld [vmem:[#allocation3 + $0x70] sm:$0xff]
    %v186 = vld [vmem:[#allocation3 + $0x78] sm:$0xff]
    %v187 = vld [vmem:[#allocation3 + $0x80] sm:$0xff]
    %v188 = vld [vmem:[#allocation3 + $0x88] sm:$0xff]
    %v189 = vld [vmem:[#allocation3 + $0x90] sm:$0xff]
    %v190 = vld [vmem:[#allocation3 + $0x98] sm:$0xff]
    %v191 = vld [vmem:[#allocation3 + $0xa0] sm:$0xff]
    %v192 = vld [vmem:[#allocation3 + $0xa8] sm:$0xff]
    %v193 = vld [vmem:[#allocation3 + $0xb0] sm:$0xff]
    %v194 = vld [vmem:[#allocation3 + $0xb8] sm:$0xff]
    %v195 = vld [vmem:[#allocation3 + $0xc0] sm:$0xff]
    %v196 = vld [vmem:[#allocation3 + $0xc8] sm:$0xff]
    %v197 = vld [vmem:[#allocation3 + $0xd0] sm:$0xff]
    %v198 = vld [vmem:[#allocation3 + $0xd8] sm:$0xff]
    %v199 = vld [vmem:[#allocation3 + $0xe0] sm:$0xff]
    %v200 = vld [vmem:[#allocation3 + $0xe8] sm:$0xff]
    %v201 = vld [vmem:[#allocation3 + $0xf0] sm:$0xff]
    %v202 = vld [vmem:[#allocation3 + $0xf8] sm:$0xff]
    %v203 = vld [vmem:[#allocation6] sm:$0xf]
    %v204 = vld [vmem:[#allocation6 + $0x4] sm:$0xf]
    %v205 = vld [vmem:[#allocation6 + $0x8] sm:$0xf]
    %v206 = vld [vmem:[#allocation6 + $0xc] sm:$0xf]
    %v207 = vld [vmem:[#allocation6 + $0x10] sm:$0xf]
    %v208 = vld [vmem:[#allocation6 + $0x14] sm:$0xf]
    %v209 = vld [vmem:[#allocation6 + $0x18] sm:$0xf]
    %v210 = vld [vmem:[#allocation6 + $0x1c] sm:$0xf]
    %v211 = vld [vmem:[#allocation6 + $0x20] sm:$0xf]
    %v212 = vld [vmem:[#allocation6 + $0x24] sm:$0xf]
    %v213 = vld [vmem:[#allocation6 + $0x28] sm:$0xf]
    %v214 = vld [vmem:[#allocation6 + $0x2c] sm:$0xf]
    %v215 = vld [vmem:[#allocation6 + $0x30] sm:$0xf]
    %v216 = vld [vmem:[#allocation6 + $0x34] sm:$0xf]
    %v217 = vld [vmem:[#allocation6 + $0x38] sm:$0xf]
    %v218 = vld [vmem:[#allocation6 + $0x3c] sm:$0xf]
    %v219 = vld [vmem:[#allocation6 + $0x40] sm:$0xf]
    %v220 = vld [vmem:[#allocation6 + $0x44] sm:$0xf]
    %v221 = vld [vmem:[#allocation6 + $0x48] sm:$0xf]
    %v222 = vld [vmem:[#allocation6 + $0x4c] sm:$0xf]
    %v223 = vld [vmem:[#allocation6 + $0x50] sm:$0xf]
    %v224 = vld [vmem:[#allocation6 + $0x54] sm:$0xf]
    %v225 = vld [vmem:[#allocation6 + $0x58] sm:$0xf]
    %v226 = vld [vmem:[#allocation6 + $0x5c] sm:$0xf]
    %v227 = vld [vmem:[#allocation6 + $0x60] sm:$0xf]
    %v228 = vld [vmem:[#allocation6 + $0x64] sm:$0xf]
    %v229 = vld [vmem:[#allocation6 + $0x68] sm:$0xf]
    %v230 = vld [vmem:[#allocation6 + $0x6c] sm:$0xf]
    %v231 = vld [vmem:[#allocation6 + $0x70] sm:$0xf]
    %v232 = vld [vmem:[#allocation6 + $0x74] sm:$0xf]
    %v233 = vld [vmem:[#allocation6 + $0x78] sm:$0xf]
    %v234 = vld [vmem:[#allocation6 + $0x7c] sm:$0xf]
    %v267 = vunpack.c.l.b16 %v171
    %v268 = vunpack.c.h.b16 %v171
    %v269 = vunpack.c.l.b16 %v172
    %v270 = vunpack.c.h.b16 %v172
    %v271 = vunpack.c.l.b16 %v173
    %v272 = vunpack.c.h.b16 %v173
    %v273 = vunpack.c.l.b16 %v174
    %v274 = vunpack.c.h.b16 %v174
    %v275 = vunpack.c.l.b16 %v175
    %v276 = vunpack.c.h.b16 %v175
    %v277 = vunpack.c.l.b16 %v176
    %v278 = vunpack.c.h.b16 %v176
    %v279 = vunpack.c.l.b16 %v177
    %v280 = vunpack.c.h.b16 %v177
    %v281 = vunpack.c.l.b16 %v178
    %v282 = vunpack.c.h.b16 %v178
    %v283 = vunpack.c.l.b16 %v179
    %v284 = vunpack.c.h.b16 %v179
    %v285 = vunpack.c.l.b16 %v180
    %v286 = vunpack.c.h.b16 %v180
    %v287 = vunpack.c.l.b16 %v181
    %v288 = vunpack.c.h.b16 %v181
    %v289 = vunpack.c.l.b16 %v182
    %v290 = vunpack.c.h.b16 %v182
    %v291 = vunpack.c.l.b16 %v183
    %v292 = vunpack.c.h.b16 %v183
    %v293 = vunpack.c.l.b16 %v184
    %v294 = vunpack.c.h.b16 %v184
    %v295 = vunpack.c.l.b16 %v185
    %v296 = vunpack.c.h.b16 %v185
    %v297 = vunpack.c.l.b16 %v186
    %v298 = vunpack.c.h.b16 %v186
    %v299 = vunpack.c.l.b16 %v187
    %v300 = vunpack.c.h.b16 %v187
    %v301 = vunpack.c.l.b16 %v188
    %v302 = vunpack.c.h.b16 %v188
    %v303 = vunpack.c.l.b16 %v189
    %v304 = vunpack.c.h.b16 %v189
    %v305 = vunpack.c.l.b16 %v190
    %v306 = vunpack.c.h.b16 %v190
    %v307 = vunpack.c.l.b16 %v191
    %v308 = vunpack.c.h.b16 %v191
    %v309 = vunpack.c.l.b16 %v192
    %v310 = vunpack.c.h.b16 %v192
    %v311 = vunpack.c.l.b16 %v193
    %v312 = vunpack.c.h.b16 %v193
    %v313 = vunpack.c.l.b16 %v194
    %v314 = vunpack.c.h.b16 %v194
    %v315 = vunpack.c.l.b16 %v195
    %v316 = vunpack.c.h.b16 %v195
    %v317 = vunpack.c.l.b16 %v196
    %v318 = vunpack.c.h.b16 %v196
    %v319 = vunpack.c.l.b16 %v197
    %v320 = vunpack.c.h.b16 %v197
    %v321 = vunpack.c.l.b16 %v198
    %v322 = vunpack.c.h.b16 %v198
    %v323 = vunpack.c.l.b16 %v199
    %v324 = vunpack.c.h.b16 %v199
    %v325 = vunpack.c.l.b16 %v200
    %v326 = vunpack.c.h.b16 %v200
    %v327 = vunpack.c.l.b16 %v201
    %v328 = vunpack.c.h.b16 %v201
    %v329 = vunpack.c.l.b16 %v202
    %v330 = vunpack.c.h.b16 %v202
    %v331 = vpack.c.b16 %v269, %v267
    %v332 = vpack.c.b16 %v270, %v268
    %v333 = vpack.c.b16 %v273, %v271
    %v334 = vpack.c.b16 %v274, %v272
    %v335 = vpack.c.b16 %v277, %v275
    %v336 = vpack.c.b16 %v278, %v276
    %v337 = vpack.c.b16 %v281, %v279
    %v338 = vpack.c.b16 %v282, %v280
    %v339 = vpack.c.b16 %v285, %v283
    %v340 = vpack.c.b16 %v286, %v284
    %v341 = vpack.c.b16 %v289, %v287
    %v342 = vpack.c.b16 %v290, %v288
    %v343 = vpack.c.b16 %v293, %v291
    %v344 = vpack.c.b16 %v294, %v292
    %v345 = vpack.c.b16 %v297, %v295
    %v346 = vpack.c.b16 %v298, %v296
    %v347 = vpack.c.b16 %v301, %v299
    %v348 = vpack.c.b16 %v302, %v300
    %v349 = vpack.c.b16 %v305, %v303
    %v350 = vpack.c.b16 %v306, %v304
    %v351 = vpack.c.b16 %v309, %v307
    %v352 = vpack.c.b16 %v310, %v308
    %v353 = vpack.c.b16 %v313, %v311
    %v354 = vpack.c.b16 %v314, %v312
    %v355 = vpack.c.b16 %v317, %v315
    %v356 = vpack.c.b16 %v318, %v316
    %v357 = vpack.c.b16 %v321, %v319
    %v358 = vpack.c.b16 %v322, %v320
    %v359 = vpack.c.b16 %v325, %v323
    %v360 = vpack.c.b16 %v326, %v324
    %v361 = vpack.c.b16 %v329, %v327
    %v362 = vpack.c.b16 %v330, %v328
    %v427 = vunpack.c.l.b16 %v203
    %v428 = vunpack.c.l.b16 %v204
    %v429 = vunpack.c.l.b16 %v205
    %v430 = vunpack.c.l.b16 %v206
    %v431 = vunpack.c.l.b16 %v207
    %v432 = vunpack.c.l.b16 %v208
    %v433 = vunpack.c.l.b16 %v209
    %v434 = vunpack.c.l.b16 %v210
    %v435 = vunpack.c.l.b16 %v211
    %v436 = vunpack.c.l.b16 %v212
    %v437 = vunpack.c.l.b16 %v213
    %v438 = vunpack.c.l.b16 %v214
    %v439 = vunpack.c.l.b16 %v215
    %v440 = vunpack.c.l.b16 %v216
    %v441 = vunpack.c.l.b16 %v217
    %v442 = vunpack.c.l.b16 %v218
    %v443 = vunpack.c.l.b16 %v219
    %v444 = vunpack.c.l.b16 %v220
    %v445 = vunpack.c.l.b16 %v221
    %v446 = vunpack.c.l.b16 %v222
    %v447 = vunpack.c.l.b16 %v223
    %v448 = vunpack.c.l.b16 %v224
    %v449 = vunpack.c.l.b16 %v225
    %v450 = vunpack.c.l.b16 %v226
    %v451 = vunpack.c.l.b16 %v227
    %v452 = vunpack.c.l.b16 %v228
    %v453 = vunpack.c.l.b16 %v229
    %v454 = vunpack.c.l.b16 %v230
    %v455 = vunpack.c.l.b16 %v231
    %v456 = vunpack.c.l.b16 %v232
    %v457 = vunpack.c.l.b16 %v233
    %v458 = vunpack.c.l.b16 %v234
    %v459 = vpack.c.b16 %v428, %v427
    %v460 = vpack.c.b16 %v430, %v429
    %v461 = vpack.c.b16 %v432, %v431
    %v462 = vpack.c.b16 %v434, %v433
    %v463 = vpack.c.b16 %v436, %v435
    %v464 = vpack.c.b16 %v438, %v437
    %v465 = vpack.c.b16 %v440, %v439
    %v466 = vpack.c.b16 %v442, %v441
    %v467 = vpack.c.b16 %v444, %v443
    %v468 = vpack.c.b16 %v446, %v445
    %v469 = vpack.c.b16 %v448, %v447
    %v470 = vpack.c.b16 %v450, %v449
    %v471 = vpack.c.b16 %v452, %v451
    %v472 = vpack.c.b16 %v454, %v453
    %v473 = vpack.c.b16 %v456, %v455
    %v474 = vpack.c.b16 %v458, %v457
    %491 = vmatprep.subr.bf16.mxu0 0
    %492 = vmatpush1.bf16.msra.mxu0 %v459
    %493 = vmatprep.subr.bf16.mxu0 0
    %494 = vmatpush1.bf16.msra.mxu0 %v460
    %495 = vmatprep.subr.bf16.mxu0 0
    %496 = vmatpush1.bf16.msra.mxu0 %v461
    %497 = vmatprep.subr.bf16.mxu0 0
    %498 = vmatpush1.bf16.msra.mxu0 %v462
    %499 = vmatprep.subr.bf16.mxu0 0
    %500 = vmatpush1.bf16.msra.mxu0 %v463
    %501 = vmatprep.subr.bf16.mxu0 0
    %502 = vmatpush1.bf16.msra.mxu0 %v464
    %503 = vmatprep.subr.bf16.mxu0 0
    %504 = vmatpush1.bf16.msra.mxu0 %v465
    %505 = vmatprep.subr.bf16.mxu0 0
    %506 = vmatpush1.bf16.msra.mxu0 %v466
    %507 = vmatprep.subr.bf16.mxu0 0
    %508 = vmatpush1.bf16.msra.mxu0 %v467
    %509 = vmatprep.subr.bf16.mxu0 0
    %510 = vmatpush1.bf16.msra.mxu0 %v468
    %511 = vmatprep.subr.bf16.mxu0 0
    %512 = vmatpush1.bf16.msra.mxu0 %v469
    %513 = vmatprep.subr.bf16.mxu0 0
    %514 = vmatpush1.bf16.msra.mxu0 %v470
    %515 = vmatprep.subr.bf16.mxu0 0
    %516 = vmatpush1.bf16.msra.mxu0 %v471
    %517 = vmatprep.subr.bf16.mxu0 0
    %518 = vmatpush1.bf16.msra.mxu0 %v472
    %519 = vmatprep.subr.bf16.mxu0 0
    %520 = vmatpush1.bf16.msra.mxu0 %v473
    %521 = vmatprep.subr.bf16.mxu0 0
    %522 = vmatpush1.bf16.msra.mxu0 %v474
    %523 = vmatprep.mubr.bf16.mxu0 %v332
    %524 = vmatmul.mubr.bf16.gmra.mrb[0].mxu0 %v331
    %v525 = vpop.f32.mrb[0].mxu0
    %v526 = vadd.f32 0.0, %v525
    %v527 = vpop.f32.mrb[0].mxu0
    %v528 = vpop.f32.mrb[0].mxu0
    %v529 = vadd.f32 0.0, %v528
    %v530 = vpop.f32.mrb[0].mxu0
    %531 = vmatprep.mubr.bf16.mxu0 %v334
    %532 = vmatmul.mubr.bf16.gmra.mrb[0].mxu0 %v333
    %v533 = vpop.f32.mrb[0].mxu0
    %v534 = vadd.f32 0.0, %v533
    %v535 = vpop.f32.mrb[0].mxu0
    %v536 = vpop.f32.mrb[0].mxu0
    %v537 = vadd.f32 0.0, %v536
    %v538 = vpop.f32.mrb[0].mxu0
    %539 = vmatprep.mubr.bf16.mxu0 %v336
    %540 = vmatmul.mubr.bf16.gmra.mrb[0].mxu0 %v335
    %v541 = vpop.f32.mrb[0].mxu0
    %v542 = vadd.f32 0.0, %v541
    %v543 = vpop.f32.mrb[0].mxu0
    %v544 = vpop.f32.mrb[0].mxu0
    %v545 = vadd.f32 0.0, %v544
    %v546 = vpop.f32.mrb[0].mxu0
    %547 = vmatprep.mubr.bf16.mxu0 %v338
    %548 = vmatmul.mubr.bf16.gmra.mrb[0].mxu0 %v337
    %v549 = vpop.f32.mrb[0].mxu0
    %v550 = vadd.f32 0.0, %v549
    %v551 = vpop.f32.mrb[0].mxu0
    %v552 = vpop.f32.mrb[0].mxu0
    %v553 = vadd.f32 0.0, %v552
    %v554 = vpop.f32.mrb[0].mxu0
    %555 = vmatprep.mubr.bf16.mxu0 %v340
    %556 = vmatmul.mubr.bf16.gmra.mrb[0].mxu0 %v339
    %v557 = vpop.f32.mrb[0].mxu0
    %v558 = vadd.f32 0.0, %v557
    %v559 = vpop.f32.mrb[0].mxu0
    %v560 = vpop.f32.mrb[0].mxu0
    %v561 = vadd.f32 0.0, %v560
    %v562 = vpop.f32.mrb[0].mxu0
    %563 = vmatprep.mubr.bf16.mxu0 %v342
    %564 = vmatmul.mubr.bf16.gmra.mrb[0].mxu0 %v341
    %v565 = vpop.f32.mrb[0].mxu0
    %v566 = vadd.f32 0.0, %v565
    %v567 = vpop.f32.mrb[0].mxu0
    %v568 = vpop.f32.mrb[0].mxu0
    %v569 = vadd.f32 0.0, %v568
    %v570 = vpop.f32.mrb[0].mxu0
    %571 = vmatprep.mubr.bf16.mxu0 %v344
    %572 = vmatmul.mubr.bf16.gmra.mrb[0].mxu0 %v343
    %v573 = vpop.f32.mrb[0].mxu0
    %v574 = vadd.f32 0.0, %v573
    %v575 = vpop.f32.mrb[0].mxu0
    %v576 = vpop.f32.mrb[0].mxu0
    %v577 = vadd.f32 0.0, %v576
    %v578 = vpop.f32.mrb[0].mxu0
    %579 = vmatprep.mubr.bf16.mxu0 %v346
    %580 = vmatmul.mubr.bf16.gmra.mrb[0].mxu0 %v345
    %v581 = vpop.f32.mrb[0].mxu0
    %v582 = vadd.f32 0.0, %v581
    %v583 = vpop.f32.mrb[0].mxu0
    %v584 = vpop.f32.mrb[0].mxu0
    %v585 = vadd.f32 0.0, %v584
    %v586 = vpop.f32.mrb[0].mxu0
    %587 = vmatprep.mubr.bf16.mxu0 %v348
    %588 = vmatmul.mubr.bf16.gmra.mrb[0].mxu0 %v347
    %v589 = vpop.f32.mrb[0].mxu0
    %v590 = vadd.f32 0.0, %v589
    %v591 = vpop.f32.mrb[0].mxu0
    %v592 = vpop.f32.mrb[0].mxu0
    %v593 = vadd.f32 0.0, %v592
    %v594 = vpop.f32.mrb[0].mxu0
    %595 = vmatprep.mubr.bf16.mxu0 %v350
    %596 = vmatmul.mubr.bf16.gmra.mrb[0].mxu0 %v349
    %v597 = vpop.f32.mrb[0].mxu0
    %v598 = vadd.f32 0.0, %v597
    %v599 = vpop.f32.mrb[0].mxu0
    %v600 = vpop.f32.mrb[0].mxu0
    %v601 = vadd.f32 0.0, %v600
    %v602 = vpop.f32.mrb[0].mxu0
    %603 = vmatprep.mubr.bf16.mxu0 %v352
    %604 = vmatmul.mubr.bf16.gmra.mrb[0].mxu0 %v351
    %v605 = vpop.f32.mrb[0].mxu0
    %v606 = vadd.f32 0.0, %v605
    %v607 = vpop.f32.mrb[0].mxu0
    %v608 = vpop.f32.mrb[0].mxu0
    %v609 = vadd.f32 0.0, %v608
    %v610 = vpop.f32.mrb[0].mxu0
    %611 = vmatprep.mubr.bf16.mxu0 %v354
    %612 = vmatmul.mubr.bf16.gmra.mrb[0].mxu0 %v353
    %v613 = vpop.f32.mrb[0].mxu0
    %v614 = vadd.f32 0.0, %v613
    %v615 = vpop.f32.mrb[0].mxu0
    %v616 = vpop.f32.mrb[0].mxu0
    %v617 = vadd.f32 0.0, %v616
    %v618 = vpop.f32.mrb[0].mxu0
    %619 = vmatprep.mubr.bf16.mxu0 %v356
    %620 = vmatmul.mubr.bf16.gmra.mrb[0].mxu0 %v355
    %v621 = vpop.f32.mrb[0].mxu0
    %v622 = vadd.f32 0.0, %v621
    %v623 = vpop.f32.mrb[0].mxu0
    %v624 = vpop.f32.mrb[0].mxu0
    %v625 = vadd.f32 0.0, %v624
    %v626 = vpop.f32.mrb[0].mxu0
    %627 = vmatprep.mubr.bf16.mxu0 %v358
    %628 = vmatmul.mubr.bf16.gmra.mrb[0].mxu0 %v357
    %v629 = vpop.f32.mrb[0].mxu0
    %v630 = vadd.f32 0.0, %v629
    %v631 = vpop.f32.mrb[0].mxu0
    %v632 = vpop.f32.mrb[0].mxu0
    %v633 = vadd.f32 0.0, %v632
    %v634 = vpop.f32.mrb[0].mxu0
    %635 = vmatprep.mubr.bf16.mxu0 %v360
    %636 = vmatmul.mubr.bf16.gmra.mrb[0].mxu0 %v359
    %v637 = vpop.f32.mrb[0].mxu0
    %v638 = vadd.f32 0.0, %v637
    %v639 = vpop.f32.mrb[0].mxu0
    %v640 = vpop.f32.mrb[0].mxu0
    %v641 = vadd.f32 0.0, %v640
    %v642 = vpop.f32.mrb[0].mxu0
    %643 = vmatprep.mubr.bf16.mxu0 %v362
    %644 = vmatmul.mubr.bf16.gmra.mrb[0].mxu0 %v361
    %v645 = vpop.f32.mrb[0].mxu0
    %v646 = vadd.f32 0.0, %v645
    %v647 = vpop.f32.mrb[0].mxu0
    %v648 = vpop.f32.mrb[0].mxu0
    %v649 = vadd.f32 0.0, %v648
    %v650 = vpop.f32.mrb[0].mxu0
    %651 = vdwg.mxu0
    %v652 = vadd.f32 %v139, %v526
    %v653 = vadd.f32 %v140, %v529
    %v654 = vadd.f32 %v141, %v534
    %v655 = vadd.f32 %v142, %v537
    %v656 = vadd.f32 %v143, %v542
    %v657 = vadd.f32 %v144, %v545
    %v658 = vadd.f32 %v145, %v550
    %v659 = vadd.f32 %v146, %v553
    %v660 = vadd.f32 %v147, %v558
    %v661 = vadd.f32 %v148, %v561
    %v662 = vadd.f32 %v149, %v566
    %v663 = vadd.f32 %v150, %v569
    %v664 = vadd.f32 %v151, %v574
    %v665 = vadd.f32 %v152, %v577
    %v666 = vadd.f32 %v153, %v582
    %v667 = vadd.f32 %v154, %v585
    %v668 = vadd.f32 %v155, %v590
    %v669 = vadd.f32 %v156, %v593
    %v670 = vadd.f32 %v157, %v598
    %v671 = vadd.f32 %v158, %v601
    %v672 = vadd.f32 %v159, %v606
    %v673 = vadd.f32 %v160, %v609
    %v674 = vadd.f32 %v161, %v614
    %v675 = vadd.f32 %v162, %v617
    %v676 = vadd.f32 %v163, %v622
    %v677 = vadd.f32 %v164, %v625
    %v678 = vadd.f32 %v165, %v630
    %v679 = vadd.f32 %v166, %v633
    %v680 = vadd.f32 %v167, %v638
    %v681 = vadd.f32 %v168, %v641
    %v682 = vadd.f32 %v169, %v646
    %v683 = vadd.f32 %v170, %v649
    %684 = vst [vmem:[#allocation2] sm:$0xff] %v652
    %685 = vst [vmem:[#allocation2 + $0x8] sm:$0xff] %v653
    %686 = vst [vmem:[#allocation2 + $0x10] sm:$0xff] %v654
    %687 = vst [vmem:[#allocation2 + $0x18] sm:$0xff] %v655
    %688 = vst [vmem:[#allocation2 + $0x20] sm:$0xff] %v656
    %689 = vst [vmem:[#allocation2 + $0x28] sm:$0xff] %v657
    %690 = vst [vmem:[#allocation2 + $0x30] sm:$0xff] %v658
    %691 = vst [vmem:[#allocation2 + $0x38] sm:$0xff] %v659
    %692 = vst [vmem:[#allocation2 + $0x40] sm:$0xff] %v660
    %693 = vst [vmem:[#allocation2 + $0x48] sm:$0xff] %v661
    %694 = vst [vmem:[#allocation2 + $0x50] sm:$0xff] %v662
    %695 = vst [vmem:[#allocation2 + $0x58] sm:$0xff] %v663
    %696 = vst [vmem:[#allocation2 + $0x60] sm:$0xff] %v664
    %697 = vst [vmem:[#allocation2 + $0x68] sm:$0xff] %v665
    %698 = vst [vmem:[#allocation2 + $0x70] sm:$0xff] %v666
    %699 = vst [vmem:[#allocation2 + $0x78] sm:$0xff] %v667
    %700 = vst [vmem:[#allocation2 + $0x80] sm:$0xff] %v668
    %701 = vst [vmem:[#allocation2 + $0x88] sm:$0xff] %v669
    %702 = vst [vmem:[#allocation2 + $0x90] sm:$0xff] %v670
    %703 = vst [vmem:[#allocation2 + $0x98] sm:$0xff] %v671
    %704 = vst [vmem:[#allocation2 + $0xa0] sm:$0xff] %v672
    %705 = vst [vmem:[#allocation2 + $0xa8] sm:$0xff] %v673
    %706 = vst [vmem:[#allocation2 + $0xb0] sm:$0xff] %v674
    %707 = vst [vmem:[#allocation2 + $0xb8] sm:$0xff] %v675
    %708 = vst [vmem:[#allocation2 + $0xc0] sm:$0xff] %v676
    %709 = vst [vmem:[#allocation2 + $0xc8] sm:$0xff] %v677
    %710 = vst [vmem:[#allocation2 + $0xd0] sm:$0xff] %v678
    %711 = vst [vmem:[#allocation2 + $0xd8] sm:$0xff] %v679
    %712 = vst [vmem:[#allocation2 + $0xe0] sm:$0xff] %v680
    %713 = vst [vmem:[#allocation2 + $0xe8] sm:$0xff] %v681
    %714 = vst [vmem:[#allocation2 + $0xf0] sm:$0xff] %v682
    %715 = vst [vmem:[#allocation2 + $0xf8] sm:$0xff] %v683
    // Predicated region
    $region54: #{tpu_custom_call.1} parent=1 // pred_check
      %p716 = pneg %p103
    $region55: #{tpu_custom_call.1} parent=1 // pred_check_branch
      %718 = sbr.rel (%p716) target = $region57
    $region56: #{tpu_custom_call.1} parent=1 // pred_region
      %v719 = vld [vmem:[#allocation2] sm:$0xff]
      %v720 = vld [vmem:[#allocation2 + $0x8] sm:$0xff]
      %v721 = vld [vmem:[#allocation2 + $0x10] sm:$0xff]
      %v722 = vld [vmem:[#allocation2 + $0x18] sm:$0xff]
      %v723 = vld [vmem:[#allocation2 + $0x20] sm:$0xff]
      %v724 = vld [vmem:[#allocation2 + $0x28] sm:$0xff]
      %v725 = vld [vmem:[#allocation2 + $0x30] sm:$0xff]
      %v726 = vld [vmem:[#allocation2 + $0x38] sm:$0xff]
      %v727 = vld [vmem:[#allocation2 + $0x40] sm:$0xff]
      %v728 = vld [vmem:[#allocation2 + $0x48] sm:$0xff]
      %v729 = vld [vmem:[#allocation2 + $0x50] sm:$0xff]
      %v730 = vld [vmem:[#allocation2 + $0x58] sm:$0xff]
      %v731 = vld [vmem:[#allocation2 + $0x60] sm:$0xff]
      %v732 = vld [vmem:[#allocation2 + $0x68] sm:$0xff]
      %v733 = vld [vmem:[#allocation2 + $0x70] sm:$0xff]
      %v734 = vld [vmem:[#allocation2 + $0x78] sm:$0xff]
      %v735 = vld [vmem:[#allocation2 + $0x80] sm:$0xff]
      %v736 = vld [vmem:[#allocation2 + $0x88] sm:$0xff]
      %v737 = vld [vmem:[#allocation2 + $0x90] sm:$0xff]
      %v738 = vld [vmem:[#allocation2 + $0x98] sm:$0xff]
      %v739 = vld [vmem:[#allocation2 + $0xa0] sm:$0xff]
      %v740 = vld [vmem:[#allocation2 + $0xa8] sm:$0xff]
      %v741 = vld [vmem:[#allocation2 + $0xb0] sm:$0xff]
      %v742 = vld [vmem:[#allocation2 + $0xb8] sm:$0xff]
      %v743 = vld [vmem:[#allocation2 + $0xc0] sm:$0xff]
      %v744 = vld [vmem:[#allocation2 + $0xc8] sm:$0xff]
      %v745 = vld [vmem:[#allocation2 + $0xd0] sm:$0xff]
      %v746 = vld [vmem:[#allocation2 + $0xd8] sm:$0xff]
      %v747 = vld [vmem:[#allocation2 + $0xe0] sm:$0xff]
      %v748 = vld [vmem:[#allocation2 + $0xe8] sm:$0xff]
      %v749 = vld [vmem:[#allocation2 + $0xf0] sm:$0xff]
      %v750 = vld [vmem:[#allocation2 + $0xf8] sm:$0xff]
      %v751 = vpack.c.bf16 %v720, %v719
      %v752 = vpack.c.bf16 %v722, %v721
      %v753 = vpack.c.bf16 %v724, %v723
      %v754 = vpack.c.bf16 %v726, %v725
      %v755 = vpack.c.bf16 %v728, %v727
      %v756 = vpack.c.bf16 %v730, %v729
      %v757 = vpack.c.bf16 %v732, %v731
      %v758 = vpack.c.bf16 %v734, %v733
      %v759 = vpack.c.bf16 %v736, %v735
      %v760 = vpack.c.bf16 %v738, %v737
      %v761 = vpack.c.bf16 %v740, %v739
      %v762 = vpack.c.bf16 %v742, %v741
      %v763 = vpack.c.bf16 %v744, %v743
      %v764 = vpack.c.bf16 %v746, %v745
      %v765 = vpack.c.bf16 %v748, %v747
      %v766 = vpack.c.bf16 %v750, %v749
      %v767 = vld [vmem:[#allocation8] sm:$0xf]
      %v768 = vld [vmem:[#allocation8 + $0x4] sm:$0xf]
      %v769 = vld [vmem:[#allocation8 + $0x8] sm:$0xf]
      %v770 = vld [vmem:[#allocation8 + $0xc] sm:$0xf]
      %v771 = vld [vmem:[#allocation8 + $0x10] sm:$0xf]
      %v772 = vld [vmem:[#allocation8 + $0x14] sm:$0xf]
      %v773 = vld [vmem:[#allocation8 + $0x18] sm:$0xf]
      %v774 = vld [vmem:[#allocation8 + $0x1c] sm:$0xf]
      %v775 = vld [vmem:[#allocation8 + $0x20] sm:$0xf]
      %v776 = vld [vmem:[#allocation8 + $0x24] sm:$0xf]
      %v777 = vld [vmem:[#allocation8 + $0x28] sm:$0xf]
      %v778 = vld [vmem:[#allocation8 + $0x2c] sm:$0xf]
      %v779 = vld [vmem:[#allocation8 + $0x30] sm:$0xf]
      %v780 = vld [vmem:[#allocation8 + $0x34] sm:$0xf]
      %v781 = vld [vmem:[#allocation8 + $0x38] sm:$0xf]
      %v782 = vld [vmem:[#allocation8 + $0x3c] sm:$0xf]
      %v783 = vld [vmem:[#allocation9] sm:$0x1]
      %v785 = vlaneseq
      %v786 = vshrl.u32 %v785, 7
      %v787 = vsub.s32 0, %v786
      %v788 = vrot.slane %v783, %v787
      %v806 = vunpack.c.l.b16 %v767
      %v807 = vunpack.c.l.b16 %v768
      %v808 = vunpack.c.l.b16 %v769
      %v809 = vunpack.c.l.b16 %v770
      %v810 = vunpack.c.l.b16 %v771
      %v811 = vunpack.c.l.b16 %v772
      %v812 = vunpack.c.l.b16 %v773
      %v813 = vunpack.c.l.b16 %v774
      %v814 = vunpack.c.l.b16 %v775
      %v815 = vunpack.c.l.b16 %v776
      %v816 = vunpack.c.l.b16 %v777
      %v817 = vunpack.c.l.b16 %v778
      %v818 = vunpack.c.l.b16 %v779
      %v819 = vunpack.c.l.b16 %v780
      %v820 = vunpack.c.l.b16 %v781
      %v821 = vunpack.c.l.b16 %v782
      %v822 = vpack.c.b16 %v807, %v806
      %v823 = vpack.c.b16 %v809, %v808
      %v824 = vpack.c.b16 %v811, %v810
      %v825 = vpack.c.b16 %v813, %v812
      %v826 = vpack.c.b16 %v815, %v814
      %v827 = vpack.c.b16 %v817, %v816
      %v828 = vpack.c.b16 %v819, %v818
      %v829 = vpack.c.b16 %v821, %v820
      %838 = vmatprep.subr.bf16.mxu0 0
      %839 = vmatpush1.bf16.msra.mxu0 %v822
      %840 = vmatprep.subr.bf16.mxu0 0
      %841 = vmatpush1.bf16.msra.mxu0 %v823
      %842 = vmatprep.subr.bf16.mxu0 0
      %843 = vmatpush1.bf16.msra.mxu0 %v824
      %844 = vmatprep.subr.bf16.mxu0 0
      %845 = vmatpush1.bf16.msra.mxu0 %v825
      %846 = vmatprep.subr.bf16.mxu0 0
      %847 = vmatpush1.bf16.msra.mxu0 %v826
      %848 = vmatprep.subr.bf16.mxu0 0
      %849 = vmatpush1.bf16.msra.mxu0 %v827
      %850 = vmatprep.subr.bf16.mxu0 0
      %851 = vmatpush1.bf16.msra.mxu0 %v828
      %852 = vmatprep.subr.bf16.mxu0 0
      %853 = vmatpush1.bf16.msra.mxu0 %v829
      %854 = vmatprep.subr.bf16.mxu0 0
      %855 = vmatpush1.bf16.msra.mxu0 0
      %856 = vmatprep.subr.bf16.mxu0 0
      %857 = vmatpush1.bf16.msra.mxu0 0
      %858 = vmatprep.subr.bf16.mxu0 0
      %859 = vmatpush1.bf16.msra.mxu0 0
      %860 = vmatprep.subr.bf16.mxu0 0
      %861 = vmatpush1.bf16.msra.mxu0 0
      %862 = vmatprep.subr.bf16.mxu0 0
      %863 = vmatpush1.bf16.msra.mxu0 0
      %864 = vmatprep.subr.bf16.mxu0 0
      %865 = vmatpush1.bf16.msra.mxu0 0
      %866 = vmatprep.subr.bf16.mxu0 0
      %867 = vmatpush1.bf16.msra.mxu0 0
      %868 = vmatprep.subr.bf16.mxu0 0
      %869 = vmatpush1.bf16.msra.mxu0 0
      %870 = vmatprep.mubr.bf16.mxu0 0
      %871 = vmatmul.mubr.bf16.gmra.mrb[0].mxu0 %v751
      %v872 = vpop.f32.mrb[0].mxu0
      %v873 = vadd.f32 %v788, %v872
      %v874 = vpop.f32.mrb[0].mxu0
      %v875 = vpop.f32.mrb[0].mxu0
      %v876 = vadd.f32 %v788, %v875
      %v877 = vpop.f32.mrb[0].mxu0
      %878 = vmatprep.mubr.bf16.mxu0 0
      %879 = vmatmul.mubr.bf16.gmra.mrb[0].mxu0 %v752
      %v880 = vpop.f32.mrb[0].mxu0
      %v881 = vadd.f32 %v788, %v880
      %v882 = vpop.f32.mrb[0].mxu0
      %v883 = vpop.f32.mrb[0].mxu0
      %v884 = vadd.f32 %v788, %v883
      %v885 = vpop.f32.mrb[0].mxu0
      %886 = vmatprep.mubr.bf16.mxu0 0
      %887 = vmatmul.mubr.bf16.gmra.mrb[0].mxu0 %v753
      %v888 = vpop.f32.mrb[0].mxu0
      %v889 = vadd.f32 %v788, %v888
      %v890 = vpop.f32.mrb[0].mxu0
      %v891 = vpop.f32.mrb[0].mxu0
      %v892 = vadd.f32 %v788, %v891
      %v893 = vpop.f32.mrb[0].mxu0
      %894 = vmatprep.mubr.bf16.mxu0 0
      %895 = vmatmul.mubr.bf16.gmra.mrb[0].mxu0 %v754
      %v896 = vpop.f32.mrb[0].mxu0
      %v897 = vadd.f32 %v788, %v896
      %v898 = vpop.f32.mrb[0].mxu0
      %v899 = vpop.f32.mrb[0].mxu0
      %v900 = vadd.f32 %v788, %v899
      %v901 = vpop.f32.mrb[0].mxu0
      %902 = vmatprep.mubr.bf16.mxu0 0
      %903 = vmatmul.mubr.bf16.gmra.mrb[0].mxu0 %v755
      %v904 = vpop.f32.mrb[0].mxu0
      %v905 = vadd.f32 %v788, %v904
      %v906 = vpop.f32.mrb[0].mxu0
      %v907 = vpop.f32.mrb[0].mxu0
      %v908 = vadd.f32 %v788, %v907
      %v909 = vpop.f32.mrb[0].mxu0
      %910 = vmatprep.mubr.bf16.mxu0 0
      %911 = vmatmul.mubr.bf16.gmra.mrb[0].mxu0 %v756
      %v912 = vpop.f32.mrb[0].mxu0
      %v913 = vadd.f32 %v788, %v912
      %v914 = vpop.f32.mrb[0].mxu0
      %v915 = vpop.f32.mrb[0].mxu0
      %v916 = vadd.f32 %v788, %v915
      %v917 = vpop.f32.mrb[0].mxu0
      %918 = vmatprep.mubr.bf16.mxu0 0
      %919 = vmatmul.mubr.bf16.gmra.mrb[0].mxu0 %v757
      %v920 = vpop.f32.mrb[0].mxu0
      %v921 = vadd.f32 %v788, %v920
      %v922 = vpop.f32.mrb[0].mxu0
      %v923 = vpop.f32.mrb[0].mxu0
      %v924 = vadd.f32 %v788, %v923
      %v925 = vpop.f32.mrb[0].mxu0
      %926 = vmatprep.mubr.bf16.mxu0 0
      %927 = vmatmul.mubr.bf16.gmra.mrb[0].mxu0 %v758
      %v928 = vpop.f32.mrb[0].mxu0
      %v929 = vadd.f32 %v788, %v928
      %v930 = vpop.f32.mrb[0].mxu0
      %v931 = vpop.f32.mrb[0].mxu0
      %v932 = vadd.f32 %v788, %v931
      %v933 = vpop.f32.mrb[0].mxu0
      %934 = vmatprep.mubr.bf16.mxu0 0
      %935 = vmatmul.mubr.bf16.gmra.mrb[0].mxu0 %v759
      %v936 = vpop.f32.mrb[0].mxu0
      %v937 = vadd.f32 %v788, %v936
      %v938 = vpop.f32.mrb[0].mxu0
      %v939 = vpop.f32.mrb[0].mxu0
      %v940 = vadd.f32 %v788, %v939
      %v941 = vpop.f32.mrb[0].mxu0
      %942 = vmatprep.mubr.bf16.mxu0 0
      %943 = vmatmul.mubr.bf16.gmra.mrb[0].mxu0 %v760
      %v944 = vpop.f32.mrb[0].mxu0
      %v945 = vadd.f32 %v788, %v944
      %v946 = vpop.f32.mrb[0].mxu0
      %v947 = vpop.f32.mrb[0].mxu0
      %v948 = vadd.f32 %v788, %v947
      %v949 = vpop.f32.mrb[0].mxu0
      %950 = vmatprep.mubr.bf16.mxu0 0
      %951 = vmatmul.mubr.bf16.gmra.mrb[0].mxu0 %v761
      %v952 = vpop.f32.mrb[0].mxu0
      %v953 = vadd.f32 %v788, %v952
      %v954 = vpop.f32.mrb[0].mxu0
      %v955 = vpop.f32.mrb[0].mxu0
      %v956 = vadd.f32 %v788, %v955
      %v957 = vpop.f32.mrb[0].mxu0
      %958 = vmatprep.mubr.bf16.mxu0 0
      %959 = vmatmul.mubr.bf16.gmra.mrb[0].mxu0 %v762
      %v960 = vpop.f32.mrb[0].mxu0
      %v961 = vadd.f32 %v788, %v960
      %v962 = vpop.f32.mrb[0].mxu0
      %v963 = vpop.f32.mrb[0].mxu0
      %v964 = vadd.f32 %v788, %v963
      %v965 = vpop.f32.mrb[0].mxu0
      %966 = vmatprep.mubr.bf16.mxu0 0
      %967 = vmatmul.mubr.bf16.gmra.mrb[0].mxu0 %v763
      %v968 = vpop.f32.mrb[0].mxu0
      %v969 = vadd.f32 %v788, %v968
      %v970 = vpop.f32.mrb[0].mxu0
      %v971 = vpop.f32.mrb[0].mxu0
      %v972 = vadd.f32 %v788, %v971
      %v973 = vpop.f32.mrb[0].mxu0
      %974 = vmatprep.mubr.bf16.mxu0 0
      %975 = vmatmul.mubr.bf16.gmra.mrb[0].mxu0 %v764
      %v976 = vpop.f32.mrb[0].mxu0
      %v977 = vadd.f32 %v788, %v976
      %v978 = vpop.f32.mrb[0].mxu0
      %v979 = vpop.f32.mrb[0].mxu0
      %v980 = vadd.f32 %v788, %v979
      %v981 = vpop.f32.mrb[0].mxu0
      %982 = vmatprep.mubr.bf16.mxu0 0
      %983 = vmatmul.mubr.bf16.gmra.mrb[0].mxu0 %v765
      %v984 = vpop.f32.mrb[0].mxu0
      %v985 = vadd.f32 %v788, %v984
      %v986 = vpop.f32.mrb[0].mxu0
      %v987 = vpop.f32.mrb[0].mxu0
      %v988 = vadd.f32 %v788, %v987
      %v989 = vpop.f32.mrb[0].mxu0
      %990 = vmatprep.mubr.bf16.mxu0 0
      %991 = vmatmul.mubr.bf16.gmra.mrb[0].mxu0 %v766
      %v992 = vpop.f32.mrb[0].mxu0
      %v993 = vadd.f32 %v788, %v992
      %v994 = vpop.f32.mrb[0].mxu0
      %v995 = vpop.f32.mrb[0].mxu0
      %v996 = vadd.f32 %v788, %v995
      %v997 = vpop.f32.mrb[0].mxu0
      %998 = vdwg.mxu0
      %999 = vadd.xlane.f32.xlu0 %v873
      %v1000 = vpop.xlane.xlu0 %999
      %1001 = vadd.xlane.f32.xlu0 %v876
      %v1002 = vpop.xlane.xlu0 %1001
      %1003 = vadd.xlane.f32.xlu0 %v881
      %v1004 = vpop.xlane.xlu0 %1003
      %1005 = vadd.xlane.f32.xlu0 %v884
      %v1006 = vpop.xlane.xlu0 %1005
      %1007 = vadd.xlane.f32.xlu0 %v889
      %v1008 = vpop.xlane.xlu0 %1007
      %1009 = vadd.xlane.f32.xlu0 %v892
      %v1010 = vpop.xlane.xlu0 %1009
      %1011 = vadd.xlane.f32.xlu0 %v897
      %v1012 = vpop.xlane.xlu0 %1011
      %1013 = vadd.xlane.f32.xlu0 %v900
      %v1014 = vpop.xlane.xlu0 %1013
      %1015 = vadd.xlane.f32.xlu0 %v905
      %v1016 = vpop.xlane.xlu0 %1015
      %1017 = vadd.xlane.f32.xlu0 %v908
      %v1018 = vpop.xlane.xlu0 %1017
      %1019 = vadd.xlane.f32.xlu0 %v913
      %v1020 = vpop.xlane.xlu0 %1019
      %1021 = vadd.xlane.f32.xlu0 %v916
      %v1022 = vpop.xlane.xlu0 %1021
      %1023 = vadd.xlane.f32.xlu0 %v921
      %v1024 = vpop.xlane.xlu0 %1023
      %1025 = vadd.xlane.f32.xlu0 %v924
      %v1026 = vpop.xlane.xlu0 %1025
      %1027 = vadd.xlane.f32.xlu0 %v929
      %v1028 = vpop.xlane.xlu0 %1027
      %1029 = vadd.xlane.f32.xlu0 %v932
      %v1030 = vpop.xlane.xlu0 %1029
      %1031 = vadd.xlane.f32.xlu0 %v937
      %v1032 = vpop.xlane.xlu0 %1031
      %1033 = vadd.xlane.f32.xlu0 %v940
      %v1034 = vpop.xlane.xlu0 %1033
      %1035 = vadd.xlane.f32.xlu0 %v945
      %v1036 = vpop.xlane.xlu0 %1035
      %1037 = vadd.xlane.f32.xlu0 %v948
      %v1038 = vpop.xlane.xlu0 %1037
      %1039 = vadd.xlane.f32.xlu0 %v953
      %v1040 = vpop.xlane.xlu0 %1039
      %1041 = vadd.xlane.f32.xlu0 %v956
      %v1042 = vpop.xlane.xlu0 %1041
      %1043 = vadd.xlane.f32.xlu0 %v961
      %v1044 = vpop.xlane.xlu0 %1043
      %1045 = vadd.xlane.f32.xlu0 %v964
      %v1046 = vpop.xlane.xlu0 %1045
      %1047 = vadd.xlane.f32.xlu0 %v969
      %v1048 = vpop.xlane.xlu0 %1047
      %1049 = vadd.xlane.f32.xlu0 %v972
      %v1050 = vpop.xlane.xlu0 %1049
      %1051 = vadd.xlane.f32.xlu0 %v977
      %v1052 = vpop.xlane.xlu0 %1051
      %1053 = vadd.xlane.f32.xlu0 %v980
      %v1054 = vpop.xlane.xlu0 %1053
      %1055 = vadd.xlane.f32.xlu0 %v985
      %v1056 = vpop.xlane.xlu0 %1055
      %1057 = vadd.xlane.f32.xlu0 %v988
      %v1058 = vpop.xlane.xlu0 %1057
      %1059 = vadd.xlane.f32.xlu0 %v993
      %v1060 = vpop.xlane.xlu0 %1059
      %1061 = vadd.xlane.f32.xlu0 %v996
      %v1062 = vpop.xlane.xlu0 %1061
      %v1063 = vmul.f32 %v1000, 0.015625
      %v1064 = vmul.f32 %v1002, 0.015625
      %v1065 = vmul.f32 %v1004, 0.015625
      %v1066 = vmul.f32 %v1006, 0.015625
      %v1067 = vmul.f32 %v1008, 0.015625
      %v1068 = vmul.f32 %v1010, 0.015625
      %v1069 = vmul.f32 %v1012, 0.015625
      %v1070 = vmul.f32 %v1014, 0.015625
      %v1071 = vmul.f32 %v1016, 0.015625
      %v1072 = vmul.f32 %v1018, 0.015625
      %v1073 = vmul.f32 %v1020, 0.015625
      %v1074 = vmul.f32 %v1022, 0.015625
      %v1075 = vmul.f32 %v1024, 0.015625
      %v1076 = vmul.f32 %v1026, 0.015625
      %v1077 = vmul.f32 %v1028, 0.015625
      %v1078 = vmul.f32 %v1030, 0.015625
      %v1079 = vmul.f32 %v1032, 0.015625
      %v1080 = vmul.f32 %v1034, 0.015625
      %v1081 = vmul.f32 %v1036, 0.015625
      %v1082 = vmul.f32 %v1038, 0.015625
      %v1083 = vmul.f32 %v1040, 0.015625
      %v1084 = vmul.f32 %v1042, 0.015625
      %v1085 = vmul.f32 %v1044, 0.015625
      %v1086 = vmul.f32 %v1046, 0.015625
      %v1087 = vmul.f32 %v1048, 0.015625
      %v1088 = vmul.f32 %v1050, 0.015625
      %v1089 = vmul.f32 %v1052, 0.015625
      %v1090 = vmul.f32 %v1054, 0.015625
      %v1091 = vmul.f32 %v1056, 0.015625
      %v1092 = vmul.f32 %v1058, 0.015625
      %v1093 = vmul.f32 %v1060, 0.015625
      %v1094 = vmul.f32 %v1062, 0.015625
      %v1095 = vmul.f32 %v873, %v873
      %v1096 = vmul.f32 %v876, %v876
      %v1097 = vmul.f32 %v881, %v881
      %v1098 = vmul.f32 %v884, %v884
      %v1099 = vmul.f32 %v889, %v889
      %v1100 = vmul.f32 %v892, %v892
      %v1101 = vmul.f32 %v897, %v897
      %v1102 = vmul.f32 %v900, %v900
      %v1103 = vmul.f32 %v905, %v905
      %v1104 = vmul.f32 %v908, %v908
      %v1105 = vmul.f32 %v913, %v913
      %v1106 = vmul.f32 %v916, %v916
      %v1107 = vmul.f32 %v921, %v921
      %v1108 = vmul.f32 %v924, %v924
      %v1109 = vmul.f32 %v929, %v929
      %v1110 = vmul.f32 %v932, %v932
      %v1111 = vmul.f32 %v937, %v937
      %v1112 = vmul.f32 %v940, %v940
      %v1113 = vmul.f32 %v945, %v945
      %v1114 = vmul.f32 %v948, %v948
      %v1115 = vmul.f32 %v953, %v953
      %v1116 = vmul.f32 %v956, %v956
      %v1117 = vmul.f32 %v961, %v961
      %v1118 = vmul.f32 %v964, %v964
      %v1119 = vmul.f32 %v969, %v969
      %v1120 = vmul.f32 %v972, %v972
      %v1121 = vmul.f32 %v977, %v977
      %v1122 = vmul.f32 %v980, %v980
      %v1123 = vmul.f32 %v985, %v985
      %v1124 = vmul.f32 %v988, %v988
      %v1125 = vmul.f32 %v993, %v993
      %v1126 = vmul.f32 %v996, %v996
      %1127 = vadd.xlane.f32.xlu0 %v1095
      %v1128 = vpop.xlane.xlu0 %1127
      %1129 = vadd.xlane.f32.xlu0 %v1096
      %v1130 = vpop.xlane.xlu0 %1129
      %1131 = vadd.xlane.f32.xlu0 %v1097
      %v1132 = vpop.xlane.xlu0 %1131
      %1133 = vadd.xlane.f32.xlu0 %v1098
      %v1134 = vpop.xlane.xlu0 %1133
      %1135 = vadd.xlane.f32.xlu0 %v1099
      %v1136 = vpop.xlane.xlu0 %1135
      %1137 = vadd.xlane.f32.xlu0 %v1100
      %v1138 = vpop.xlane.xlu0 %1137
      %1139 = vadd.xlane.f32.xlu0 %v1101
      %v1140 = vpop.xlane.xlu0 %1139
      %1141 = vadd.xlane.f32.xlu0 %v1102
      %v1142 = vpop.xlane.xlu0 %1141
      %1143 = vadd.xlane.f32.xlu0 %v1103
      %v1144 = vpop.xlane.xlu0 %1143
      %1145 = vadd.xlane.f32.xlu0 %v1104
      %v1146 = vpop.xlane.xlu0 %1145
      %1147 = vadd.xlane.f32.xlu0 %v1105
      %v1148 = vpop.xlane.xlu0 %1147
      %1149 = vadd.xlane.f32.xlu0 %v1106
      %v1150 = vpop.xlane.xlu0 %1149
      %1151 = vadd.xlane.f32.xlu0 %v1107
      %v1152 = vpop.xlane.xlu0 %1151
      %1153 = vadd.xlane.f32.xlu0 %v1108
      %v1154 = vpop.xlane.xlu0 %1153
      %1155 = vadd.xlane.f32.xlu0 %v1109
      %v1156 = vpop.xlane.xlu0 %1155
      %1157 = vadd.xlane.f32.xlu0 %v1110
      %v1158 = vpop.xlane.xlu0 %1157
      %1159 = vadd.xlane.f32.xlu0 %v1111
      %v1160 = vpop.xlane.xlu0 %1159
      %1161 = vadd.xlane.f32.xlu0 %v1112
      %v1162 = vpop.xlane.xlu0 %1161
      %1163 = vadd.xlane.f32.xlu0 %v1113
      %v1164 = vpop.xlane.xlu0 %1163
      %1165 = vadd.xlane.f32.xlu0 %v1114
      %v1166 = vpop.xlane.xlu0 %1165
      %1167 = vadd.xlane.f32.xlu0 %v1115
      %v1168 = vpop.xlane.xlu0 %1167
      %1169 = vadd.xlane.f32.xlu0 %v1116
      %v1170 = vpop.xlane.xlu0 %1169
      %1171 = vadd.xlane.f32.xlu0 %v1117
      %v1172 = vpop.xlane.xlu0 %1171
      %1173 = vadd.xlane.f32.xlu0 %v1118
      %v1174 = vpop.xlane.xlu0 %1173
      %1175 = vadd.xlane.f32.xlu0 %v1119
      %v1176 = vpop.xlane.xlu0 %1175
      %1177 = vadd.xlane.f32.xlu0 %v1120
      %v1178 = vpop.xlane.xlu0 %1177
      %1179 = vadd.xlane.f32.xlu0 %v1121
      %v1180 = vpop.xlane.xlu0 %1179
      %1181 = vadd.xlane.f32.xlu0 %v1122
      %v1182 = vpop.xlane.xlu0 %1181
      %1183 = vadd.xlane.f32.xlu0 %v1123
      %v1184 = vpop.xlane.xlu0 %1183
      %1185 = vadd.xlane.f32.xlu0 %v1124
      %v1186 = vpop.xlane.xlu0 %1185
      %1187 = vadd.xlane.f32.xlu0 %v1125
      %v1188 = vpop.xlane.xlu0 %1187
      %1189 = vadd.xlane.f32.xlu0 %v1126
      %v1190 = vpop.xlane.xlu0 %1189
      %v1191 = vmul.f32 %v1128, 0.015625
      %v1192 = vmul.f32 %v1130, 0.015625
      %v1193 = vmul.f32 %v1132, 0.015625
      %v1194 = vmul.f32 %v1134, 0.015625
      %v1195 = vmul.f32 %v1136, 0.015625
      %v1196 = vmul.f32 %v1138, 0.015625
      %v1197 = vmul.f32 %v1140, 0.015625
      %v1198 = vmul.f32 %v1142, 0.015625
      %v1199 = vmul.f32 %v1144, 0.015625
      %v1200 = vmul.f32 %v1146, 0.015625
      %v1201 = vmul.f32 %v1148, 0.015625
      %v1202 = vmul.f32 %v1150, 0.015625
      %v1203 = vmul.f32 %v1152, 0.015625
      %v1204 = vmul.f32 %v1154, 0.015625
      %v1205 = vmul.f32 %v1156, 0.015625
      %v1206 = vmul.f32 %v1158, 0.015625
      %v1207 = vmul.f32 %v1160, 0.015625
      %v1208 = vmul.f32 %v1162, 0.015625
      %v1209 = vmul.f32 %v1164, 0.015625
      %v1210 = vmul.f32 %v1166, 0.015625
      %v1211 = vmul.f32 %v1168, 0.015625
      %v1212 = vmul.f32 %v1170, 0.015625
      %v1213 = vmul.f32 %v1172, 0.015625
      %v1214 = vmul.f32 %v1174, 0.015625
      %v1215 = vmul.f32 %v1176, 0.015625
      %v1216 = vmul.f32 %v1178, 0.015625
      %v1217 = vmul.f32 %v1180, 0.015625
      %v1218 = vmul.f32 %v1182, 0.015625
      %v1219 = vmul.f32 %v1184, 0.015625
      %v1220 = vmul.f32 %v1186, 0.015625
      %v1221 = vmul.f32 %v1188, 0.015625
      %v1222 = vmul.f32 %v1190, 0.015625
      %v1223 = vmul.f32 %v1063, %v1063
      %v1224 = vmul.f32 %v1064, %v1064
      %v1225 = vmul.f32 %v1065, %v1065
      %v1226 = vmul.f32 %v1066, %v1066
      %v1227 = vmul.f32 %v1067, %v1067
      %v1228 = vmul.f32 %v1068, %v1068
      %v1229 = vmul.f32 %v1069, %v1069
      %v1230 = vmul.f32 %v1070, %v1070
      %v1231 = vmul.f32 %v1071, %v1071
      %v1232 = vmul.f32 %v1072, %v1072
      %v1233 = vmul.f32 %v1073, %v1073
      %v1234 = vmul.f32 %v1074, %v1074
      %v1235 = vmul.f32 %v1075, %v1075
      %v1236 = vmul.f32 %v1076, %v1076
      %v1237 = vmul.f32 %v1077, %v1077
      %v1238 = vmul.f32 %v1078, %v1078
      %v1239 = vmul.f32 %v1079, %v1079
      %v1240 = vmul.f32 %v1080, %v1080
      %v1241 = vmul.f32 %v1081, %v1081
      %v1242 = vmul.f32 %v1082, %v1082
      %v1243 = vmul.f32 %v1083, %v1083
      %v1244 = vmul.f32 %v1084, %v1084
      %v1245 = vmul.f32 %v1085, %v1085
      %v1246 = vmul.f32 %v1086, %v1086
      %v1247 = vmul.f32 %v1087, %v1087
      %v1248 = vmul.f32 %v1088, %v1088
      %v1249 = vmul.f32 %v1089, %v1089
      %v1250 = vmul.f32 %v1090, %v1090
      %v1251 = vmul.f32 %v1091, %v1091
      %v1252 = vmul.f32 %v1092, %v1092
      %v1253 = vmul.f32 %v1093, %v1093
      %v1254 = vmul.f32 %v1094, %v1094
      %v1255 = vsub.f32 %v1191, %v1223
      %v1256 = vsub.f32 %v1192, %v1224
      %v1257 = vsub.f32 %v1193, %v1225
      %v1258 = vsub.f32 %v1194, %v1226
      %v1259 = vsub.f32 %v1195, %v1227
      %v1260 = vsub.f32 %v1196, %v1228
      %v1261 = vsub.f32 %v1197, %v1229
      %v1262 = vsub.f32 %v1198, %v1230
      %v1263 = vsub.f32 %v1199, %v1231
      %v1264 = vsub.f32 %v1200, %v1232
      %v1265 = vsub.f32 %v1201, %v1233
      %v1266 = vsub.f32 %v1202, %v1234
      %v1267 = vsub.f32 %v1203, %v1235
      %v1268 = vsub.f32 %v1204, %v1236
      %v1269 = vsub.f32 %v1205, %v1237
      %v1270 = vsub.f32 %v1206, %v1238
      %v1271 = vsub.f32 %v1207, %v1239
      %v1272 = vsub.f32 %v1208, %v1240
      %v1273 = vsub.f32 %v1209, %v1241
      %v1274 = vsub.f32 %v1210, %v1242
      %v1275 = vsub.f32 %v1211, %v1243
      %v1276 = vsub.f32 %v1212, %v1244
      %v1277 = vsub.f32 %v1213, %v1245
      %v1278 = vsub.f32 %v1214, %v1246
      %v1279 = vsub.f32 %v1215, %v1247
      %v1280 = vsub.f32 %v1216, %v1248
      %v1281 = vsub.f32 %v1217, %v1249
      %v1282 = vsub.f32 %v1218, %v1250
      %v1283 = vsub.f32 %v1219, %v1251
      %v1284 = vsub.f32 %v1220, %v1252
      %v1285 = vsub.f32 %v1221, %v1253
      %v1286 = vsub.f32 %v1222, %v1254
      %v1287 = vmax.f32 %v1255, 0.0
      %v1288 = vmax.f32 %v1256, 0.0
      %v1289 = vmax.f32 %v1257, 0.0
      %v1290 = vmax.f32 %v1258, 0.0
      %v1291 = vmax.f32 %v1259, 0.0
      %v1292 = vmax.f32 %v1260, 0.0
      %v1293 = vmax.f32 %v1261, 0.0
      %v1294 = vmax.f32 %v1262, 0.0
      %v1295 = vmax.f32 %v1263, 0.0
      %v1296 = vmax.f32 %v1264, 0.0
      %v1297 = vmax.f32 %v1265, 0.0
      %v1298 = vmax.f32 %v1266, 0.0
      %v1299 = vmax.f32 %v1267, 0.0
      %v1300 = vmax.f32 %v1268, 0.0
      %v1301 = vmax.f32 %v1269, 0.0
      %v1302 = vmax.f32 %v1270, 0.0
      %v1303 = vmax.f32 %v1271, 0.0
      %v1304 = vmax.f32 %v1272, 0.0
      %v1305 = vmax.f32 %v1273, 0.0
      %v1306 = vmax.f32 %v1274, 0.0
      %v1307 = vmax.f32 %v1275, 0.0
      %v1308 = vmax.f32 %v1276, 0.0
      %v1309 = vmax.f32 %v1277, 0.0
      %v1310 = vmax.f32 %v1278, 0.0
      %v1311 = vmax.f32 %v1279, 0.0
      %v1312 = vmax.f32 %v1280, 0.0
      %v1313 = vmax.f32 %v1281, 0.0
      %v1314 = vmax.f32 %v1282, 0.0
      %v1315 = vmax.f32 %v1283, 0.0
      %v1316 = vmax.f32 %v1284, 0.0
      %v1317 = vmax.f32 %v1285, 0.0
      %v1318 = vmax.f32 %v1286, 0.0
      %v1319 = vsub.f32 %v873, %v1063
      %v1320 = vsub.f32 %v876, %v1064
      %v1321 = vsub.f32 %v881, %v1065
      %v1322 = vsub.f32 %v884, %v1066
      %v1323 = vsub.f32 %v889, %v1067
      %v1324 = vsub.f32 %v892, %v1068
      %v1325 = vsub.f32 %v897, %v1069
      %v1326 = vsub.f32 %v900, %v1070
      %v1327 = vsub.f32 %v905, %v1071
      %v1328 = vsub.f32 %v908, %v1072
      %v1329 = vsub.f32 %v913, %v1073
      %v1330 = vsub.f32 %v916, %v1074
      %v1331 = vsub.f32 %v921, %v1075
      %v1332 = vsub.f32 %v924, %v1076
      %v1333 = vsub.f32 %v929, %v1077
      %v1334 = vsub.f32 %v932, %v1078
      %v1335 = vsub.f32 %v937, %v1079
      %v1336 = vsub.f32 %v940, %v1080
      %v1337 = vsub.f32 %v945, %v1081
      %v1338 = vsub.f32 %v948, %v1082
      %v1339 = vsub.f32 %v953, %v1083
      %v1340 = vsub.f32 %v956, %v1084
      %v1341 = vsub.f32 %v961, %v1085
      %v1342 = vsub.f32 %v964, %v1086
      %v1343 = vsub.f32 %v969, %v1087
      %v1344 = vsub.f32 %v972, %v1088
      %v1345 = vsub.f32 %v977, %v1089
      %v1346 = vsub.f32 %v980, %v1090
      %v1347 = vsub.f32 %v985, %v1091
      %v1348 = vsub.f32 %v988, %v1092
      %v1349 = vsub.f32 %v993, %v1093
      %v1350 = vsub.f32 %v996, %v1094
      %v1351 = vadd.f32 %v1287, 1e-05
      %v1352 = vadd.f32 %v1288, 1e-05
      %v1353 = vadd.f32 %v1289, 1e-05
      %v1354 = vadd.f32 %v1290, 1e-05
      %v1355 = vadd.f32 %v1291, 1e-05
      %v1356 = vadd.f32 %v1292, 1e-05
      %v1357 = vadd.f32 %v1293, 1e-05
      %v1358 = vadd.f32 %v1294, 1e-05
      %v1359 = vadd.f32 %v1295, 1e-05
      %v1360 = vadd.f32 %v1296, 1e-05
      %v1361 = vadd.f32 %v1297, 1e-05
      %v1362 = vadd.f32 %v1298, 1e-05
      %v1363 = vadd.f32 %v1299, 1e-05
      %v1364 = vadd.f32 %v1300, 1e-05
      %v1365 = vadd.f32 %v1301, 1e-05
      %v1366 = vadd.f32 %v1302, 1e-05
      %v1367 = vadd.f32 %v1303, 1e-05
      %v1368 = vadd.f32 %v1304, 1e-05
      %v1369 = vadd.f32 %v1305, 1e-05
      %v1370 = vadd.f32 %v1306, 1e-05
      %v1371 = vadd.f32 %v1307, 1e-05
      %v1372 = vadd.f32 %v1308, 1e-05
      %v1373 = vadd.f32 %v1309, 1e-05
      %v1374 = vadd.f32 %v1310, 1e-05
      %v1375 = vadd.f32 %v1311, 1e-05
      %v1376 = vadd.f32 %v1312, 1e-05
      %v1377 = vadd.f32 %v1313, 1e-05
      %v1378 = vadd.f32 %v1314, 1e-05
      %v1379 = vadd.f32 %v1315, 1e-05
      %v1380 = vadd.f32 %v1316, 1e-05
      %v1381 = vadd.f32 %v1317, 1e-05
      %v1382 = vadd.f32 %v1318, 1e-05
      %v1383 = vrsqrt.pop %v1351
      %v1384 = vrsqrt.pop %v1352
      %v1385 = vrsqrt.pop %v1353
      %v1386 = vrsqrt.pop %v1354
      %v1387 = vrsqrt.pop %v1355
      %v1388 = vrsqrt.pop %v1356
      %v1389 = vrsqrt.pop %v1357
      %v1390 = vrsqrt.pop %v1358
      %v1391 = vrsqrt.pop %v1359
      %v1392 = vrsqrt.pop %v1360
      %v1393 = vrsqrt.pop %v1361
      %v1394 = vrsqrt.pop %v1362
      %v1395 = vrsqrt.pop %v1363
      %v1396 = vrsqrt.pop %v1364
      %v1397 = vrsqrt.pop %v1365
      %v1398 = vrsqrt.pop %v1366
      %v1399 = vrsqrt.pop %v1367
      %v1400 = vrsqrt.pop %v1368
      %v1401 = vrsqrt.pop %v1369
      %v1402 = vrsqrt.pop %v1370
      %v1403 = vrsqrt.pop %v1371
      %v1404 = vrsqrt.pop %v1372
      %v1405 = vrsqrt.pop %v1373
      %v1406 = vrsqrt.pop %v1374
      %v1407 = vrsqrt.pop %v1375
      %v1408 = vrsqrt.pop %v1376
      %v1409 = vrsqrt.pop %v1377
      %v1410 = vrsqrt.pop %v1378
      %v1411 = vrsqrt.pop %v1379
      %v1412 = vrsqrt.pop %v1380
      %v1413 = vrsqrt.pop %v1381
      %v1414 = vrsqrt.pop %v1382
      %v1415 = vmul.f32 %v1319, %v1383
      %v1416 = vmul.f32 %v1320, %v1384
      %v1417 = vmul.f32 %v1321, %v1385
      %v1418 = vmul.f32 %v1322, %v1386
      %v1419 = vmul.f32 %v1323, %v1387
      %v1420 = vmul.f32 %v1324, %v1388
      %v1421 = vmul.f32 %v1325, %v1389
      %v1422 = vmul.f32 %v1326, %v1390
      %v1423 = vmul.f32 %v1327, %v1391
      %v1424 = vmul.f32 %v1328, %v1392
      %v1425 = vmul.f32 %v1329, %v1393
      %v1426 = vmul.f32 %v1330, %v1394
      %v1427 = vmul.f32 %v1331, %v1395
      %v1428 = vmul.f32 %v1332, %v1396
      %v1429 = vmul.f32 %v1333, %v1397
      %v1430 = vmul.f32 %v1334, %v1398
      %v1431 = vmul.f32 %v1335, %v1399
      %v1432 = vmul.f32 %v1336, %v1400
      %v1433 = vmul.f32 %v1337, %v1401
      %v1434 = vmul.f32 %v1338, %v1402
      %v1435 = vmul.f32 %v1339, %v1403
      %v1436 = vmul.f32 %v1340, %v1404
      %v1437 = vmul.f32 %v1341, %v1405
      %v1438 = vmul.f32 %v1342, %v1406
      %v1439 = vmul.f32 %v1343, %v1407
      %v1440 = vmul.f32 %v1344, %v1408
      %v1441 = vmul.f32 %v1345, %v1409
      %v1442 = vmul.f32 %v1346, %v1410
      %v1443 = vmul.f32 %v1347, %v1411
      %v1444 = vmul.f32 %v1348, %v1412
      %v1445 = vmul.f32 %v1349, %v1413
      %v1446 = vmul.f32 %v1350, %v1414
      %v1447 = vpack.c.bf16 %v1416, %v1415
      %v1448 = vpack.c.bf16 %v1418, %v1417
      %v1449 = vpack.c.bf16 %v1420, %v1419
      %v1450 = vpack.c.bf16 %v1422, %v1421
      %v1451 = vpack.c.bf16 %v1424, %v1423
      %v1452 = vpack.c.bf16 %v1426, %v1425
      %v1453 = vpack.c.bf16 %v1428, %v1427
      %v1454 = vpack.c.bf16 %v1430, %v1429
      %v1455 = vpack.c.bf16 %v1432, %v1431
      %v1456 = vpack.c.bf16 %v1434, %v1433
      %v1457 = vpack.c.bf16 %v1436, %v1435
      %v1458 = vpack.c.bf16 %v1438, %v1437
      %v1459 = vpack.c.bf16 %v1440, %v1439
      %v1460 = vpack.c.bf16 %v1442, %v1441
      %v1461 = vpack.c.bf16 %v1444, %v1443
      %v1462 = vpack.c.bf16 %v1446, %v1445
      %v1463 = vld [vmem:[#allocation11] sm:$0xf]
      %v1464 = vld [vmem:[#allocation11 + $0x4] sm:$0xf]
      %v1465 = vld [vmem:[#allocation11 + $0x8] sm:$0xf]
      %v1466 = vld [vmem:[#allocation11 + $0xc] sm:$0xf]
      %v1467 = vld [vmem:[#allocation11 + $0x10] sm:$0xf]
      %v1468 = vld [vmem:[#allocation11 + $0x14] sm:$0xf]
      %v1469 = vld [vmem:[#allocation11 + $0x18] sm:$0xf]
      %v1470 = vld [vmem:[#allocation11 + $0x1c] sm:$0xf]
      %v1471 = vld [vmem:[#allocation11 + $0x20] sm:$0xf]
      %v1472 = vld [vmem:[#allocation11 + $0x24] sm:$0xf]
      %v1473 = vld [vmem:[#allocation11 + $0x28] sm:$0xf]
      %v1474 = vld [vmem:[#allocation11 + $0x2c] sm:$0xf]
      %v1475 = vld [vmem:[#allocation11 + $0x30] sm:$0xf]
      %v1476 = vld [vmem:[#allocation11 + $0x34] sm:$0xf]
      %v1477 = vld [vmem:[#allocation11 + $0x38] sm:$0xf]
      %v1478 = vld [vmem:[#allocation11 + $0x3c] sm:$0xf]
      %v1479 = vld [vmem:[#allocation12] sm:$0x1]
      %v1481 = vlaneseq
      %v1482 = vshrl.u32 %v1481, 7
      %v1483 = vsub.s32 0, %v1482
      %v1484 = vrot.slane %v1479, %v1483
      %v1502 = vunpack.c.l.b16 %v1463
      %v1503 = vunpack.c.l.b16 %v1464
      %v1504 = vunpack.c.l.b16 %v1465
      %v1505 = vunpack.c.l.b16 %v1466
      %v1506 = vunpack.c.l.b16 %v1467
      %v1507 = vunpack.c.l.b16 %v1468
      %v1508 = vunpack.c.l.b16 %v1469
      %v1509 = vunpack.c.l.b16 %v1470
      %v1510 = vunpack.c.l.b16 %v1471
      %v1511 = vunpack.c.l.b16 %v1472
      %v1512 = vunpack.c.l.b16 %v1473
      %v1513 = vunpack.c.l.b16 %v1474
      %v1514 = vunpack.c.l.b16 %v1475
      %v1515 = vunpack.c.l.b16 %v1476
      %v1516 = vunpack.c.l.b16 %v1477
      %v1517 = vunpack.c.l.b16 %v1478
      %v1518 = vpack.c.b16 %v1503, %v1502
      %v1519 = vpack.c.b16 %v1505, %v1504
      %v1520 = vpack.c.b16 %v1507, %v1506
      %v1521 = vpack.c.b16 %v1509, %v1508
      %v1522 = vpack.c.b16 %v1511, %v1510
      %v1523 = vpack.c.b16 %v1513, %v1512
      %v1524 = vpack.c.b16 %v1515, %v1514
      %v1525 = vpack.c.b16 %v1517, %v1516
      %1534 = vmatprep.subr.bf16.mxu0 0
      %1535 = vmatpush1.bf16.msra.mxu0 %v1518
      %1536 = vmatprep.subr.bf16.mxu0 0
      %1537 = vmatpush1.bf16.msra.mxu0 %v1519
      %1538 = vmatprep.subr.bf16.mxu0 0
      %1539 = vmatpush1.bf16.msra.mxu0 %v1520
      %1540 = vmatprep.subr.bf16.mxu0 0
      %1541 = vmatpush1.bf16.msra.mxu0 %v1521
      %1542 = vmatprep.subr.bf16.mxu0 0
      %1543 = vmatpush1.bf16.msra.mxu0 %v1522
      %1544 = vmatprep.subr.bf16.mxu0 0
      %1545 = vmatpush1.bf16.msra.mxu0 %v1523
      %1546 = vmatprep.subr.bf16.mxu0 0
      %1547 = vmatpush1.bf16.msra.mxu0 %v1524
      %1548 = vmatprep.subr.bf16.mxu0 0
      %1549 = vmatpush1.bf16.msra.mxu0 %v1525
      %1550 = vmatprep.subr.bf16.mxu0 0
      %1551 = vmatpush1.bf16.msra.mxu0 0
      %1552 = vmatprep.subr.bf16.mxu0 0
      %1553 = vmatpush1.bf16.msra.mxu0 0
      %1554 = vmatprep.subr.bf16.mxu0 0
      %1555 = vmatpush1.bf16.msra.mxu0 0
      %1556 = vmatprep.subr.bf16.mxu0 0
      %1557 = vmatpush1.bf16.msra.mxu0 0
      %1558 = vmatprep.subr.bf16.mxu0 0
      %1559 = vmatpush1.bf16.msra.mxu0 0
      %1560 = vmatprep.subr.bf16.mxu0 0
      %1561 = vmatpush1.bf16.msra.mxu0 0
      %1562 = vmatprep.subr.bf16.mxu0 0
      %1563 = vmatpush1.bf16.msra.mxu0 0
      %1564 = vmatprep.subr.bf16.mxu0 0
      %1565 = vmatpush1.bf16.msra.mxu0 0
      %1566 = vmatprep.mubr.bf16.mxu0 0
      %1567 = vmatmul.mubr.bf16.gmra.mrb[0].mxu0 %v1447
      %v1568 = vpop.f32.mrb[0].mxu0
      %v1569 = vadd.f32 %v1484, %v1568
      %v1570 = vpop.f32.mrb[0].mxu0
      %v1571 = vpop.f32.mrb[0].mxu0
      %v1572 = vadd.f32 %v1484, %v1571
      %v1573 = vpop.f32.mrb[0].mxu0
      %1574 = vmatprep.mubr.bf16.mxu0 0
      %1575 = vmatmul.mubr.bf16.gmra.mrb[0].mxu0 %v1448
      %v1576 = vpop.f32.mrb[0].mxu0
      %v1577 = vadd.f32 %v1484, %v1576
      %v1578 = vpop.f32.mrb[0].mxu0
      %v1579 = vpop.f32.mrb[0].mxu0
      %v1580 = vadd.f32 %v1484, %v1579
      %v1581 = vpop.f32.mrb[0].mxu0
      %1582 = vmatprep.mubr.bf16.mxu0 0
      %1583 = vmatmul.mubr.bf16.gmra.mrb[0].mxu0 %v1449
      %v1584 = vpop.f32.mrb[0].mxu0
      %v1585 = vadd.f32 %v1484, %v1584
      %v1586 = vpop.f32.mrb[0].mxu0
      %v1587 = vpop.f32.mrb[0].mxu0
      %v1588 = vadd.f32 %v1484, %v1587
      %v1589 = vpop.f32.mrb[0].mxu0
      %1590 = vmatprep.mubr.bf16.mxu0 0
      %1591 = vmatmul.mubr.bf16.gmra.mrb[0].mxu0 %v1450
      %v1592 = vpop.f32.mrb[0].mxu0
      %v1593 = vadd.f32 %v1484, %v1592
      %v1594 = vpop.f32.mrb[0].mxu0
      %v1595 = vpop.f32.mrb[0].mxu0
      %v1596 = vadd.f32 %v1484, %v1595
      %v1597 = vpop.f32.mrb[0].mxu0
      %1598 = vmatprep.mubr.bf16.mxu0 0
      %1599 = vmatmul.mubr.bf16.gmra.mrb[0].mxu0 %v1451
      %v1600 = vpop.f32.mrb[0].mxu0
      %v1601 = vadd.f32 %v1484, %v1600
      %v1602 = vpop.f32.mrb[0].mxu0
      %v1603 = vpop.f32.mrb[0].mxu0
      %v1604 = vadd.f32 %v1484, %v1603
      %v1605 = vpop.f32.mrb[0].mxu0
      %1606 = vmatprep.mubr.bf16.mxu0 0
      %1607 = vmatmul.mubr.bf16.gmra.mrb[0].mxu0 %v1452
      %v1608 = vpop.f32.mrb[0].mxu0
      %v1609 = vadd.f32 %v1484, %v1608
      %v1610 = vpop.f32.mrb[0].mxu0
      %v1611 = vpop.f32.mrb[0].mxu0
      %v1612 = vadd.f32 %v1484, %v1611
      %v1613 = vpop.f32.mrb[0].mxu0
      %1614 = vmatprep.mubr.bf16.mxu0 0
      %1615 = vmatmul.mubr.bf16.gmra.mrb[0].mxu0 %v1453
      %v1616 = vpop.f32.mrb[0].mxu0
      %v1617 = vadd.f32 %v1484, %v1616
      %v1618 = vpop.f32.mrb[0].mxu0
      %v1619 = vpop.f32.mrb[0].mxu0
      %v1620 = vadd.f32 %v1484, %v1619
      %v1621 = vpop.f32.mrb[0].mxu0
      %1622 = vmatprep.mubr.bf16.mxu0 0
      %1623 = vmatmul.mubr.bf16.gmra.mrb[0].mxu0 %v1454
      %v1624 = vpop.f32.mrb[0].mxu0
      %v1625 = vadd.f32 %v1484, %v1624
      %v1626 = vpop.f32.mrb[0].mxu0
      %v1627 = vpop.f32.mrb[0].mxu0
      %v1628 = vadd.f32 %v1484, %v1627
      %v1629 = vpop.f32.mrb[0].mxu0
      %1630 = vmatprep.mubr.bf16.mxu0 0
      %1631 = vmatmul.mubr.bf16.gmra.mrb[0].mxu0 %v1455
      %v1632 = vpop.f32.mrb[0].mxu0
      %v1633 = vadd.f32 %v1484, %v1632
      %v1634 = vpop.f32.mrb[0].mxu0
      %v1635 = vpop.f32.mrb[0].mxu0
      %v1636 = vadd.f32 %v1484, %v1635
      %v1637 = vpop.f32.mrb[0].mxu0
      %1638 = vmatprep.mubr.bf16.mxu0 0
      %1639 = vmatmul.mubr.bf16.gmra.mrb[0].mxu0 %v1456
      %v1640 = vpop.f32.mrb[0].mxu0
      %v1641 = vadd.f32 %v1484, %v1640
      %v1642 = vpop.f32.mrb[0].mxu0
      %v1643 = vpop.f32.mrb[0].mxu0
      %v1644 = vadd.f32 %v1484, %v1643
      %v1645 = vpop.f32.mrb[0].mxu0
      %1646 = vmatprep.mubr.bf16.mxu0 0
      %1647 = vmatmul.mubr.bf16.gmra.mrb[0].mxu0 %v1457
      %v1648 = vpop.f32.mrb[0].mxu0
      %v1649 = vadd.f32 %v1484, %v1648
      %v1650 = vpop.f32.mrb[0].mxu0
      %v1651 = vpop.f32.mrb[0].mxu0
      %v1652 = vadd.f32 %v1484, %v1651
      %v1653 = vpop.f32.mrb[0].mxu0
      %1654 = vmatprep.mubr.bf16.mxu0 0
      %1655 = vmatmul.mubr.bf16.gmra.mrb[0].mxu0 %v1458
      %v1656 = vpop.f32.mrb[0].mxu0
      %v1657 = vadd.f32 %v1484, %v1656
      %v1658 = vpop.f32.mrb[0].mxu0
      %v1659 = vpop.f32.mrb[0].mxu0
      %v1660 = vadd.f32 %v1484, %v1659
      %v1661 = vpop.f32.mrb[0].mxu0
      %1662 = vmatprep.mubr.bf16.mxu0 0
      %1663 = vmatmul.mubr.bf16.gmra.mrb[0].mxu0 %v1459
      %v1664 = vpop.f32.mrb[0].mxu0
      %v1665 = vadd.f32 %v1484, %v1664
      %v1666 = vpop.f32.mrb[0].mxu0
      %v1667 = vpop.f32.mrb[0].mxu0
      %v1668 = vadd.f32 %v1484, %v1667
      %v1669 = vpop.f32.mrb[0].mxu0
      %1670 = vmatprep.mubr.bf16.mxu0 0
      %1671 = vmatmul.mubr.bf16.gmra.mrb[0].mxu0 %v1460
      %v1672 = vpop.f32.mrb[0].mxu0
      %v1673 = vadd.f32 %v1484, %v1672
      %v1674 = vpop.f32.mrb[0].mxu0
      %v1675 = vpop.f32.mrb[0].mxu0
      %v1676 = vadd.f32 %v1484, %v1675
      %v1677 = vpop.f32.mrb[0].mxu0
      %1678 = vmatprep.mubr.bf16.mxu0 0
      %1679 = vmatmul.mubr.bf16.gmra.mrb[0].mxu0 %v1461
      %v1680 = vpop.f32.mrb[0].mxu0
      %v1681 = vadd.f32 %v1484, %v1680
      %v1682 = vpop.f32.mrb[0].mxu0
      %v1683 = vpop.f32.mrb[0].mxu0
      %v1684 = vadd.f32 %v1484, %v1683
      %v1685 = vpop.f32.mrb[0].mxu0
      %1686 = vmatprep.mubr.bf16.mxu0 0
      %1687 = vmatmul.mubr.bf16.gmra.mrb[0].mxu0 %v1462
      %v1688 = vpop.f32.mrb[0].mxu0
      %v1689 = vadd.f32 %v1484, %v1688
      %v1690 = vpop.f32.mrb[0].mxu0
      %v1691 = vpop.f32.mrb[0].mxu0
      %v1692 = vadd.f32 %v1484, %v1691
      %v1693 = vpop.f32.mrb[0].mxu0
      %1694 = vdwg.mxu0
      %v1695 = vpack.c.bf16 %v1572, %v1569
      %v1696 = vpack.c.bf16 %v1580, %v1577
      %v1697 = vpack.c.bf16 %v1588, %v1585
      %v1698 = vpack.c.bf16 %v1596, %v1593
      %v1699 = vpack.c.bf16 %v1604, %v1601
      %v1700 = vpack.c.bf16 %v1612, %v1609
      %v1701 = vpack.c.bf16 %v1620, %v1617
      %v1702 = vpack.c.bf16 %v1628, %v1625
      %v1703 = vpack.c.bf16 %v1636, %v1633
      %v1704 = vpack.c.bf16 %v1644, %v1641
      %v1705 = vpack.c.bf16 %v1652, %v1649
      %v1706 = vpack.c.bf16 %v1660, %v1657
      %v1707 = vpack.c.bf16 %v1668, %v1665
      %v1708 = vpack.c.bf16 %v1676, %v1673
      %v1709 = vpack.c.bf16 %v1684, %v1681
      %v1710 = vpack.c.bf16 %v1692, %v1689
      %v1727 = vunpack.c.l.b16 %v1695
      %v1728 = vunpack.c.h.b16 %v1695
      %v1729 = vunpack.c.l.b16 %v1696
      %v1730 = vunpack.c.h.b16 %v1696
      %v1731 = vunpack.c.l.b16 %v1697
      %v1732 = vunpack.c.h.b16 %v1697
      %v1733 = vunpack.c.l.b16 %v1698
      %v1734 = vunpack.c.h.b16 %v1698
      %v1735 = vunpack.c.l.b16 %v1699
      %v1736 = vunpack.c.h.b16 %v1699
      %v1737 = vunpack.c.l.b16 %v1700
      %v1738 = vunpack.c.h.b16 %v1700
      %v1739 = vunpack.c.l.b16 %v1701
      %v1740 = vunpack.c.h.b16 %v1701
      %v1741 = vunpack.c.l.b16 %v1702
      %v1742 = vunpack.c.h.b16 %v1702
      %v1743 = vunpack.c.l.b16 %v1703
      %v1744 = vunpack.c.h.b16 %v1703
      %v1745 = vunpack.c.l.b16 %v1704
      %v1746 = vunpack.c.h.b16 %v1704
      %v1747 = vunpack.c.l.b16 %v1705
      %v1748 = vunpack.c.h.b16 %v1705
      %v1749 = vunpack.c.l.b16 %v1706
      %v1750 = vunpack.c.h.b16 %v1706
      %v1751 = vunpack.c.l.b16 %v1707
      %v1752 = vunpack.c.h.b16 %v1707
      %v1753 = vunpack.c.l.b16 %v1708
      %v1754 = vunpack.c.h.b16 %v1708
      %v1755 = vunpack.c.l.b16 %v1709
      %v1756 = vunpack.c.h.b16 %v1709
      %v1757 = vunpack.c.l.b16 %v1710
      %v1758 = vunpack.c.h.b16 %v1710
      %v1759 = vpack.c.b16 %v1727, %v1727
      %v1760 = vpack.c.b16 %v1728, %v1728
      %v1761 = vpack.c.b16 %v1729, %v1729
      %v1762 = vpack.c.b16 %v1730, %v1730
      %v1763 = vpack.c.b16 %v1731, %v1731
      %v1764 = vpack.c.b16 %v1732, %v1732
      %v1765 = vpack.c.b16 %v1733, %v1733
      %v1766 = vpack.c.b16 %v1734, %v1734
      %v1767 = vpack.c.b16 %v1735, %v1735
      %v1768 = vpack.c.b16 %v1736, %v1736
      %v1769 = vpack.c.b16 %v1737, %v1737
      %v1770 = vpack.c.b16 %v1738, %v1738
      %v1771 = vpack.c.b16 %v1739, %v1739
      %v1772 = vpack.c.b16 %v1740, %v1740
      %v1773 = vpack.c.b16 %v1741, %v1741
      %v1774 = vpack.c.b16 %v1742, %v1742
      %v1775 = vpack.c.b16 %v1743, %v1743
      %v1776 = vpack.c.b16 %v1744, %v1744
      %v1777 = vpack.c.b16 %v1745, %v1745
      %v1778 = vpack.c.b16 %v1746, %v1746
      %v1779 = vpack.c.b16 %v1747, %v1747
      %v1780 = vpack.c.b16 %v1748, %v1748
      %v1781 = vpack.c.b16 %v1749, %v1749
      %v1782 = vpack.c.b16 %v1750, %v1750
      %v1783 = vpack.c.b16 %v1751, %v1751
      %v1784 = vpack.c.b16 %v1752, %v1752
      %v1785 = vpack.c.b16 %v1753, %v1753
      %v1786 = vpack.c.b16 %v1754, %v1754
      %v1787 = vpack.c.b16 %v1755, %v1755
      %v1788 = vpack.c.b16 %v1756, %v1756
      %v1789 = vpack.c.b16 %v1757, %v1757
      %v1790 = vpack.c.b16 %v1758, %v1758
      %1823 = vst [vmem:[#allocation14] sm:$0xf] %v1759
      %1824 = vst [vmem:[#allocation14 + $0x4] sm:$0xf] %v1760
      %1825 = vst [vmem:[#allocation14 + $0x8] sm:$0xf] %v1761
      %1826 = vst [vmem:[#allocation14 + $0xc] sm:$0xf] %v1762
      %1827 = vst [vmem:[#allocation14 + $0x10] sm:$0xf] %v1763
      %1828 = vst [vmem:[#allocation14 + $0x14] sm:$0xf] %v1764
      %1829 = vst [vmem:[#allocation14 + $0x18] sm:$0xf] %v1765
      %1830 = vst [vmem:[#allocation14 + $0x1c] sm:$0xf] %v1766
      %1831 = vst [vmem:[#allocation14 + $0x20] sm:$0xf] %v1767
      %1832 = vst [vmem:[#allocation14 + $0x24] sm:$0xf] %v1768
      %1833 = vst [vmem:[#allocation14 + $0x28] sm:$0xf] %v1769
      %1834 = vst [vmem:[#allocation14 + $0x2c] sm:$0xf] %v1770
      %1835 = vst [vmem:[#allocation14 + $0x30] sm:$0xf] %v1771
      %1836 = vst [vmem:[#allocation14 + $0x34] sm:$0xf] %v1772
      %1837 = vst [vmem:[#allocation14 + $0x38] sm:$0xf] %v1773
      %1838 = vst [vmem:[#allocation14 + $0x3c] sm:$0xf] %v1774
      %1839 = vst [vmem:[#allocation14 + $0x40] sm:$0xf] %v1775
      %1840 = vst [vmem:[#allocation14 + $0x44] sm:$0xf] %v1776
      %1841 = vst [vmem:[#allocation14 + $0x48] sm:$0xf] %v1777
      %1842 = vst [vmem:[#allocation14 + $0x4c] sm:$0xf] %v1778
      %1843 = vst [vmem:[#allocation14 + $0x50] sm:$0xf] %v1779
      %1844 = vst [vmem:[#allocation14 + $0x54] sm:$0xf] %v1780
      %1845 = vst [vmem:[#allocation14 + $0x58] sm:$0xf] %v1781
      %1846 = vst [vmem:[#allocation14 + $0x5c] sm:$0xf] %v1782
      %1847 = vst [vmem:[#allocation14 + $0x60] sm:$0xf] %v1783
      %1848 = vst [vmem:[#allocation14 + $0x64] sm:$0xf] %v1784
      %1849 = vst [vmem:[#allocation14 + $0x68] sm:$0xf] %v1785
      %1850 = vst [vmem:[#allocation14 + $0x6c] sm:$0xf] %v1786
      %1851 = vst [vmem:[#allocation14 + $0x70] sm:$0xf] %v1787
      %1852 = vst [vmem:[#allocation14 + $0x74] sm:$0xf] %v1788
      %1853 = vst [vmem:[#allocation14 + $0x78] sm:$0xf] %v1789
      %1854 = vst [vmem:[#allocation14 + $0x7c] sm:$0xf] %v1790
    $region57: #{tpu_custom_call.1} parent=1 // pred_fallthru
      _
    // Predicated region
    $region58: #{tpu_custom_call.1} parent=1 // pred_check
      _
    $region59: #{tpu_custom_call.1} parent=1 // pred_check_branch
      %1856 = sbr.rel (0) target = $region61
    $region60: #{tpu_custom_call.1} parent=1 // pred_region
      %s1858 = ssub.s32 2048, 2048
      %1859 = vsyncadd [#allocation5], %s1858
      %s1860 = sshll.u32 [#allocation14], 4
      %s1861 = int_to_ptr.vmem [resolvable:$true] %s1860
      %1866 = dma.vmem_to_hbm [thread:$0]  %s1861, 2048, %s6, [#allocation5], 64, 64, 4
    $region61: #{tpu_custom_call.1} parent=1 // pred_fallthru
      _
    // Predicated region
    $region62: #{tpu_custom_call.1} parent=1 // pred_check
      _
    $region63: #{tpu_custom_call.1} parent=1 // pred_check_branch
      %1868 = sbr.rel (0) target = $region65
    $region64: #{tpu_custom_call.1} parent=1 // pred_region
      %1869 = dma.done [#allocation5], 2048
    $region65: #{tpu_custom_call.1} parent=1 // pred_fallthru
      _
    %1870 = vsyncpa [#allocation4], 1
    %1871 = vsyncpa [#allocation7], 1
    %1872 = vsyncpa [#allocation10], 1
    %1873 = vsyncpa [#allocation13], 1
    %1874 = vsyncpa [#allocation5], 1

</llo_original>
